<compile_context>
chip_gen: v7x
topology: tpu7x:2x2x1
jax: 0.10.0
libtpu: 0.0.40
codegen_flags: <defaults>
</compile_context>

<pallas_src>
import functools

import jax
import jax.numpy as jnp
from jax.experimental import pallas as pl
from jax.experimental.pallas import tpu as pltpu


# ---------------------------------------------------------------------------
# fused kernel (one batch element per grid step)
# ---------------------------------------------------------------------------
def _fused_kernel(p1_ref, w1_ref, w2_ref, w3_ref, b1_ref, b2_ref, b3_ref,
                  o_ref, a1_ref, a2_ref, *, H, W, off):
    """conv1(5x5)+relu -> conv2(3x3)+relu -> conv3(3x3), all in VMEM.

    p1_ref : (1, 75, H*W)   bf16  im2col'd 5x5x3 patches (pixels on lanes)
    w*_ref : (Cout, K)      bf16  matmul-layout weights
    b*_ref : (Cout, 1)      f32   biases
    o_ref  : (1, C3, H*W)   f32   conv3 output (pre pixel-shuffle)
    a1_ref : (64, off+H*W+off) bf16  zero-bordered flat act1 buffer
    a2_ref : (32, off+H*W+off) bf16  zero-bordered flat act2 buffer
    """
    npix = H * W

    # ---- conv1: single dense MXU matmul over pre-built patches -------------
    a1 = jnp.dot(w1_ref[...], p1_ref[0], preferred_element_type=jnp.float32)
    a1 = jnp.maximum(a1 + b1_ref[...], 0.0)              # bias + relu in f32

    # Stash act1 in its zero-bordered flat buffer.  The >= W+1 zero columns on
    # each side implement the *vertical* part of the 3x3 'same' padding.  The
    # border is re-zeroed every grid step so this is safe with per-core
    # scratch under "parallel" dimension semantics.
    a1_ref[...] = jnp.zeros(a1_ref.shape, a1_ref.dtype)
    a1_ref[:, off:off + npix] = a1.astype(jnp.bfloat16)

    # Horizontal validity masks: in the flat (h*W + w) layout a +-1 column
    # shift wraps across rows; those lanes must read zero.
    col = jax.lax.broadcasted_iota(jnp.int32, (1, npix), 1) % W
    masks = {dx: jnp.logical_and(col + dx >= 0, col + dx < W) for dx in (-1, 1)}

    def slab_3x3(src_ref):
        """(9*C, npix) im2col slab for a 3x3 'same' conv (tap-major rows)."""
        pieces = []
        for ky in range(3):
            for kx in range(3):
                dy, dx = ky - 1, kx - 1
                start = off + dy * W + dx            # static lane offset
                sh = src_ref[:, start:start + npix]
                if dx != 0:
                    sh = jnp.where(masks[dx], sh, jnp.zeros_like(sh))
                pieces.append(sh)
        # sublane-axis concat of tile-aligned (C, npix) pieces
        return jnp.concatenate(pieces, axis=0)

    # ---- conv2: one matmul, K = 9*64 = 576 ----------------------------------
    a2 = jnp.dot(w2_ref[...], slab_3x3(a1_ref),
                 preferred_element_type=jnp.float32)
    a2 = jnp.maximum(a2 + b2_ref[...], 0.0)
    a2_ref[...] = jnp.zeros(a2_ref.shape, a2_ref.dtype)
    a2_ref[:, off:off + npix] = a2.astype(jnp.bfloat16)

    # ---- conv3: one matmul, K = 9*32 = 288, no relu -------------------------
    y = jnp.dot(w3_ref[...], slab_3x3(a2_ref),
                preferred_element_type=jnp.float32)
    o_ref[0] = (y + b3_ref[...]).astype(o_ref.dtype)


# ---------------------------------------------------------------------------
# host-side layout plumbing
# ---------------------------------------------------------------------------
def _im2col_5x5(x_nchw):
    """(N,3,H,W) -> (N, 75, H*W) bf16 patch slab; row index = (ky*5+kx)*3 + ci."""
    N, C, H, W = x_nchw.shape
    xp = jnp.pad(x_nchw, ((0, 0), (0, 0), (2, 2), (2, 2)))
    taps = [xp[:, :, ky:ky + H, kx:kx + W] for ky in range(5) for kx in range(5)]
    p = jnp.stack(taps, axis=1)                       # (N, 25, 3, H, W)
    return p.reshape(N, 25 * C, H * W).astype(jnp.bfloat16)


def _matmul_weight(w):
    """(KH, KW, Cin, Cout) -> (Cout, KH*KW*Cin) bf16, row order (ky, kx, ci)."""
    KH, KW, Cin, Cout = w.shape
    return jnp.transpose(w, (3, 0, 1, 2)).reshape(Cout, KH * KW * Cin).astype(
        jnp.bfloat16)


def _fused_forward(p1, w1t, w2t, w3t, b1, b2, b3, *, H, W):
    N, K1, npix = p1.shape
    C1, C2, C3 = w1t.shape[0], w2t.shape[0], w3t.shape[0]

    # Zero border >= W+1 on each side of the flat activation buffers, rounded
    # up to a lane tile so the interior store is 128-lane aligned.
    off = max(128, pl.cdiv(W + 1, 128) * 128)
    buf = npix + 2 * off

    kernel = functools.partial(_fused_kernel, H=H, W=W, off=off)

    flops = 2 * N * npix * (K1 * C1 + 9 * C1 * C2 + 9 * C2 * C3)
    bytes_accessed = (p1.size * p1.dtype.itemsize
                      + (w1t.size + w2t.size + w3t.size) * 2
                      + (b1.size + b2.size + b3.size) * 4
                      + N * C3 * npix * 4)

    return pl.pallas_call(
        kernel,
        out_shape=jax.ShapeDtypeStruct((N, C3, npix), jnp.float32),
        grid=(N,),
        in_specs=[
            pl.BlockSpec((1, K1, npix), lambda n: (n, 0, 0)),
            pl.BlockSpec((C1, K1), lambda n: (0, 0)),
            pl.BlockSpec((C2, 9 * C1), lambda n: (0, 0)),
            pl.BlockSpec((C3, 9 * C2), lambda n: (0, 0)),
            pl.BlockSpec((C1, 1), lambda n: (0, 0)),
            pl.BlockSpec((C2, 1), lambda n: (0, 0)),
            pl.BlockSpec((C3, 1), lambda n: (0, 0)),
        ],
        out_specs=pl.BlockSpec((1, C3, npix), lambda n: (n, 0, 0)),
        scratch_shapes=[
            pltpu.VMEM((C1, buf), jnp.bfloat16),
            pltpu.VMEM((C2, buf), jnp.bfloat16),
        ],
        compiler_params=pltpu.CompilerParams(
            dimension_semantics=("parallel",),
            vmem_limit_bytes=32 * 1024 * 1024,
        ),
        cost_estimate=pl.CostEstimate(
            flops=flops, transcendentals=0, bytes_accessed=bytes_accessed),
    )(p1, w1t, w2t, w3t, b1, b2, b3)


def conv_sub_pixel_forward(x_nchw, params, upscale_factor):
    """Forward pass matching ConvSubPixel.forward (NCHW in / NCHW out)."""
    N, Cin, H, W = x_nchw.shape
    r = upscale_factor

    p1 = _im2col_5x5(x_nchw)
    y = _fused_forward(
        p1,
        _matmul_weight(params["w1"]),
        _matmul_weight(params["w2"]),
        _matmul_weight(params["w3"]),
        params["b1"].reshape(-1, 1).astype(jnp.float32),
        params["b2"].reshape(-1, 1).astype(jnp.float32),
        params["b3"].reshape(-1, 1).astype(jnp.float32),
        H=H, W=W)                                        # (N, 3*r*r, H*W)

    # PixelShuffle (PyTorch ordering c*r*r + ry*r + rx) + NCHW layout; this
    # touches only the tiny (N, 3*r*r, H*W) kernel output.
    y = y.reshape(N, 3, r, r, H, W)
    y = jnp.transpose(y, (0, 1, 4, 2, 5, 3))             # n, c, h, ry, w, rx
    return y.reshape(N, 3, H * r, W * r)


# ---------------------------------------------------------------------------
# parameters (orthogonal init, like the PyTorch module)
# ---------------------------------------------------------------------------
def init_params(upscale_factor, key):
    gain_relu = jnp.sqrt(2.0)  # init.calculate_gain('relu')
    orth = jax.nn.initializers.orthogonal

    def conv_w(key, cout, cin, kh, kw, gain):
        w_flat = orth(scale=gain)(key, (cout, cin * kh * kw), jnp.float32)
        w_oihw = w_flat.reshape(cout, cin, kh, kw)
        return jnp.transpose(w_oihw, (2, 3, 1, 0))       # -> (KH, KW, Cin, Cout)

    k1, k2, k3 = jax.random.split(key, 3)
    r2c = upscale_factor ** 2 * 3
    return {
        "w1": conv_w(k1, 64, 3, 5, 5, gain_relu),
        "b1": jnp.zeros((64,), jnp.float32),
        "w2": conv_w(k2, 32, 64, 3, 3, gain_relu),
        "b2": jnp.zeros((32,), jnp.float32),
        "w3": conv_w(k3, r2c, 32, 3, 3, 1.0),
        "b3": jnp.zeros((r2c,), jnp.float32),
    }


# ---------------------------------------------------------------------------
# pure-XLA reference (same bf16 operand rounding, f32 accumulation)
# ---------------------------------------------------------------------------
def _reference_forward(x_nchw, params, r):
    bf = lambda a: a.astype(jnp.bfloat16).astype(jnp.float32)

    def conv(inp, w, b):
        out = jax.lax.conv_general_dilated(
            bf(inp), bf(w), window_strides=(1, 1), padding="SAME",
            dimension_numbers=("NCHW", "HWIO", "NCHW"))
        return out + b.reshape(1, -1, 1, 1)

    a1 = jnp.maximum(conv(x_nchw, params["w1"], params["b1"]), 0.0)
    a2 = jnp.maximum(conv(a1, params["w2"], params["b2"]), 0.0)
    y = conv(a2, params["w3"], params["b3"])
    N, C, H, W = y.shape
    y = y.reshape(N, 3, r, r, H, W)
    y = jnp.transpose(y, (0, 1, 4, 2, 5, 3))
    return y.reshape(N, 3, H * r, W * r)


if __name__ == "__main__":
    upscale_factor = 2
    key = jax.random.PRNGKey(0)
    kx, kp = jax.random.split(key)

    x = jax.random.normal(kx, (2, 3, 16, 16), jnp.float32)
    params = init_params(upscale_factor, kp)

    fwd = jax.jit(functools.partial(conv_sub_pixel_forward,
                                    upscale_factor=upscale_factor))
    out = jax.block_until_ready(fwd(x, params))

    expected_shape = (2, 3, 16 * upscale_factor, 16 * upscale_factor)
    assert out.shape == expected_shape, (out.shape, expected_shape)
    assert out.dtype == jnp.float32

    # Numerical sanity check vs. an XLA conv reference that applies the same
    # bf16 operand rounding (with f32 accumulation) as the kernel.
    ref = jax.block_until_ready(_reference_forward(x, params, upscale_factor))
    max_err = float(jnp.max(jnp.abs(out - ref)))
    assert max_err < 5e-2, f"max abs error vs reference: {max_err}"

    print("KERNEL_OK")
</pallas_src>

<mosaic_0001>
module attributes {stable_mosaic.version = 11 : i64} {
  func.func @_fused_kernel(%arg0: i32, %arg1: memref<1x75x256xbf16, #tpu.memory_space<vmem>>, %arg2: memref<64x75xbf16, #tpu.memory_space<vmem>>, %arg3: memref<32x576xbf16, #tpu.memory_space<vmem>>, %arg4: memref<12x288xbf16, #tpu.memory_space<vmem>>, %arg5: memref<64x1xf32, #tpu.memory_space<vmem>>, %arg6: memref<32x1xf32, #tpu.memory_space<vmem>>, %arg7: memref<12x1xf32, #tpu.memory_space<vmem>>, %arg8: memref<1x12x256xf32, #tpu.memory_space<vmem>>, %arg9: memref<64x512xbf16, #tpu.memory_space<vmem>>, %arg10: memref<32x512xbf16, #tpu.memory_space<vmem>>) attributes {dimension_semantics = [#tpu.dimension_semantics<parallel>], iteration_bounds = array<i64: 2>, scalar_prefetch = 0 : i64, scratch_operands = 2 : i64, tpu.core_type = #tpu.core_type<tc>, window_params = [{transform_indices = @transform_0, window_bounds = array<i64: 1, 75, 256>}, {pipeline_mode = #tpu.pipeline_mode<synchronous>, transform_indices = @transform_1, window_bounds = array<i64: 64, 75>}, {pipeline_mode = #tpu.pipeline_mode<synchronous>, transform_indices = @transform_2, window_bounds = array<i64: 32, 576>}, {pipeline_mode = #tpu.pipeline_mode<synchronous>, transform_indices = @transform_3, window_bounds = array<i64: 12, 288>}, {pipeline_mode = #tpu.pipeline_mode<synchronous>, transform_indices = @transform_4, window_bounds = array<i64: 64, 1>}, {pipeline_mode = #tpu.pipeline_mode<synchronous>, transform_indices = @transform_5, window_bounds = array<i64: 32, 1>}, {pipeline_mode = #tpu.pipeline_mode<synchronous>, transform_indices = @transform_6, window_bounds = array<i64: 12, 1>}, {transform_indices = @transform_7, window_bounds = array<i64: 1, 12, 256>}]} {
    %c0 = arith.constant 0 : index
    %c0_0 = arith.constant 0 : index
    %0 = vector.load %arg2[%c0, %c0_0] : memref<64x75xbf16, #tpu.memory_space<vmem>>, vector<64x75xbf16>
    %c0_1 = arith.constant 0 : index
    %c0_2 = arith.constant 0 : index
    %c0_3 = arith.constant 0 : index
    %1 = vector.load %arg1[%c0_1, %c0_2, %c0_3] : memref<1x75x256xbf16, #tpu.memory_space<vmem>>, vector<1x75x256xbf16>
    %2 = vector.shape_cast %1 : vector<1x75x256xbf16> to vector<75x256xbf16>
    %cst = arith.constant dense<0.000000e+00> : vector<64x256xf32>
    %3 = tpu.matmul %0, %2, %cst {dimension_numbers = #tpu.dot_dimension_numbers<[1], [0], [0], [1], [0, 0, 1, 1], [], []>} : vector<64x75xbf16>, vector<75x256xbf16>, vector<64x256xf32> -> vector<64x256xf32>
    %c0_4 = arith.constant 0 : index
    %c0_5 = arith.constant 0 : index
    %4 = vector.load %arg5[%c0_4, %c0_5] : memref<64x1xf32, #tpu.memory_space<vmem>>, vector<64x1xf32>
    %5 = vector.broadcast %4 : vector<64x1xf32> to vector<64x256xf32>
    %6 = arith.addf %3, %5 : vector<64x256xf32>
    %cst_6 = arith.constant 0.000000e+00 : f32
    %7 = vector.broadcast %cst_6 : f32 to vector<64x256xf32>
    %8 = arith.maximumf %6, %7 : vector<64x256xf32>
    %cst_7 = arith.constant 0.000000e+00 : bf16
    %9 = vector.broadcast %cst_7 : bf16 to vector<64x512xbf16>
    %c0_8 = arith.constant 0 : index
    %c0_9 = arith.constant 0 : index
    %10 = vector.load %arg9[%c0_8, %c0_9] : memref<64x512xbf16, #tpu.memory_space<vmem>>, vector<64x512xbf16>
    tpu.vector_store %arg9[%c0_8, %c0_9], %9 {strides = array<i32>} : memref<64x512xbf16, #tpu.memory_space<vmem>>, vector<64x512xbf16>,
    %11 = arith.truncf %8 : vector<64x256xf32> to vector<64x256xbf16>
    %c0_10 = arith.constant 0 : index
    %c128 = arith.constant 128 : index
    %12 = vector.load %arg9[%c0_10, %c128] : memref<64x512xbf16, #tpu.memory_space<vmem>>, vector<64x256xbf16>
    tpu.vector_store %arg9[%c0_10, %c128], %11 {strides = array<i32>} : memref<64x512xbf16, #tpu.memory_space<vmem>>, vector<64x256xbf16>,
    %13 = tpu.iota {dimensions = array<i32: 1>} : vector<1x256xi32>
    %c16_i32 = arith.constant 16 : i32
    %c0_i32 = arith.constant 0 : i32
    %14 = arith.cmpi eq, %c16_i32, %c0_i32 : i32
    %c1_i32 = arith.constant 1 : i32
    %15 = arith.select %14, %c1_i32, %c16_i32 : i32
    %16 = vector.broadcast %15 : i32 to vector<1x256xi32>
    %17 = arith.remsi %13, %16 : vector<1x256xi32>
    %c0_i32_11 = arith.constant 0 : i32
    %18 = vector.broadcast %c0_i32_11 : i32 to vector<1x256xi32>
    %19 = arith.cmpi ne, %17, %18 : vector<1x256xi32>
    %c0_i32_12 = arith.constant 0 : i32
    %20 = vector.broadcast %c0_i32_12 : i32 to vector<1x256xi32>
    %21 = arith.cmpi slt, %17, %20 : vector<1x256xi32>
    %c0_i32_13 = arith.constant 0 : i32
    %22 = arith.cmpi slt, %15, %c0_i32_13 : i32
    %23 = vector.broadcast %22 : i1 to vector<1x256xi1>
    %24 = vector.broadcast %23 : vector<1x256xi1> to vector<1x256xi1>
    %25 = arith.xori %21, %24 : vector<1x256xi1>
    %26 = arith.andi %25, %19 : vector<1x256xi1>
    %27 = vector.broadcast %15 : i32 to vector<1x256xi32>
    %28 = arith.addi %17, %27 : vector<1x256xi32>
    %29 = arith.select %26, %28, %17 : vector<1x256xi1>, vector<1x256xi32>
    %c-1_i32 = arith.constant -1 : i32
    %30 = vector.broadcast %c-1_i32 : i32 to vector<1x256xi32>
    %31 = arith.addi %29, %30 : vector<1x256xi32>
    %c0_i32_14 = arith.constant 0 : i32
    %32 = vector.broadcast %c0_i32_14 : i32 to vector<1x256xi32>
    %33 = arith.cmpi sge, %31, %32 : vector<1x256xi32>
    %c-1_i32_15 = arith.constant -1 : i32
    %34 = vector.broadcast %c-1_i32_15 : i32 to vector<1x256xi32>
    %35 = arith.addi %29, %34 : vector<1x256xi32>
    %c16_i32_16 = arith.constant 16 : i32
    %36 = vector.broadcast %c16_i32_16 : i32 to vector<1x256xi32>
    %37 = arith.cmpi slt, %35, %36 : vector<1x256xi32>
    %38 = arith.andi %33, %37 : vector<1x256xi1>
    %c1_i32_17 = arith.constant 1 : i32
    %39 = vector.broadcast %c1_i32_17 : i32 to vector<1x256xi32>
    %40 = arith.addi %29, %39 : vector<1x256xi32>
    %c0_i32_18 = arith.constant 0 : i32
    %41 = vector.broadcast %c0_i32_18 : i32 to vector<1x256xi32>
    %42 = arith.cmpi sge, %40, %41 : vector<1x256xi32>
    %c1_i32_19 = arith.constant 1 : i32
    %43 = vector.broadcast %c1_i32_19 : i32 to vector<1x256xi32>
    %44 = arith.addi %29, %43 : vector<1x256xi32>
    %c16_i32_20 = arith.constant 16 : i32
    %45 = vector.broadcast %c16_i32_20 : i32 to vector<1x256xi32>
    %46 = arith.cmpi slt, %44, %45 : vector<1x256xi32>
    %47 = arith.andi %42, %46 : vector<1x256xi1>
    %c0_21 = arith.constant 0 : index
    %c0_22 = arith.constant 0 : index
    %48 = vector.load %arg3[%c0_21, %c0_22] : memref<32x576xbf16, #tpu.memory_space<vmem>>, vector<32x576xbf16>
    %c0_23 = arith.constant 0 : index
    %c111 = arith.constant 111 : index
    %49 = vector.load %arg9[%c0_23, %c111] : memref<64x512xbf16, #tpu.memory_space<vmem>>, vector<64x256xbf16>
    %cst_24 = arith.constant 0.000000e+00 : bf16
    %50 = vector.broadcast %cst_24 : bf16 to vector<64x256xbf16>
    %51 = vector.shape_cast %38 : vector<1x256xi1> to vector<1x256xi1>
    %52 = vector.broadcast %51 : vector<1x256xi1> to vector<64x256xi1>
    %53 = arith.select %52, %49, %50 : vector<64x256xi1>, vector<64x256xbf16>
    %c0_25 = arith.constant 0 : index
    %c112 = arith.constant 112 : index
    %54 = vector.load %arg9[%c0_25, %c112] : memref<64x512xbf16, #tpu.memory_space<vmem>>, vector<64x256xbf16>
    %c0_26 = arith.constant 0 : index
    %c113 = arith.constant 113 : index
    %55 = vector.load %arg9[%c0_26, %c113] : memref<64x512xbf16, #tpu.memory_space<vmem>>, vector<64x256xbf16>
    %cst_27 = arith.constant 0.000000e+00 : bf16
    %56 = vector.broadcast %cst_27 : bf16 to vector<64x256xbf16>
    %57 = vector.shape_cast %47 : vector<1x256xi1> to vector<1x256xi1>
    %58 = vector.broadcast %57 : vector<1x256xi1> to vector<64x256xi1>
    %59 = arith.select %58, %55, %56 : vector<64x256xi1>, vector<64x256xbf16>
    %c0_28 = arith.constant 0 : index
    %c127 = arith.constant 127 : index
    %60 = vector.load %arg9[%c0_28, %c127] : memref<64x512xbf16, #tpu.memory_space<vmem>>, vector<64x256xbf16>
    %cst_29 = arith.constant 0.000000e+00 : bf16
    %61 = vector.broadcast %cst_29 : bf16 to vector<64x256xbf16>
    %62 = vector.shape_cast %38 : vector<1x256xi1> to vector<1x256xi1>
    %63 = vector.broadcast %62 : vector<1x256xi1> to vector<64x256xi1>
    %64 = arith.select %63, %60, %61 : vector<64x256xi1>, vector<64x256xbf16>
    %c0_30 = arith.constant 0 : index
    %c128_31 = arith.constant 128 : index
    %65 = vector.load %arg9[%c0_30, %c128_31] : memref<64x512xbf16, #tpu.memory_space<vmem>>, vector<64x256xbf16>
    %c0_32 = arith.constant 0 : index
    %c129 = arith.constant 129 : index
    %66 = vector.load %arg9[%c0_32, %c129] : memref<64x512xbf16, #tpu.memory_space<vmem>>, vector<64x256xbf16>
    %cst_33 = arith.constant 0.000000e+00 : bf16
    %67 = vector.broadcast %cst_33 : bf16 to vector<64x256xbf16>
    %68 = vector.shape_cast %47 : vector<1x256xi1> to vector<1x256xi1>
    %69 = vector.broadcast %68 : vector<1x256xi1> to vector<64x256xi1>
    %70 = arith.select %69, %66, %67 : vector<64x256xi1>, vector<64x256xbf16>
    %c0_34 = arith.constant 0 : index
    %c143 = arith.constant 143 : index
    %71 = vector.load %arg9[%c0_34, %c143] : memref<64x512xbf16, #tpu.memory_space<vmem>>, vector<64x256xbf16>
    %cst_35 = arith.constant 0.000000e+00 : bf16
    %72 = vector.broadcast %cst_35 : bf16 to vector<64x256xbf16>
    %73 = vector.shape_cast %38 : vector<1x256xi1> to vector<1x256xi1>
    %74 = vector.broadcast %73 : vector<1x256xi1> to vector<64x256xi1>
    %75 = arith.select %74, %71, %72 : vector<64x256xi1>, vector<64x256xbf16>
    %c0_36 = arith.constant 0 : index
    %c144 = arith.constant 144 : index
    %76 = vector.load %arg9[%c0_36, %c144] : memref<64x512xbf16, #tpu.memory_space<vmem>>, vector<64x256xbf16>
    %c0_37 = arith.constant 0 : index
    %c145 = arith.constant 145 : index
    %77 = vector.load %arg9[%c0_37, %c145] : memref<64x512xbf16, #tpu.memory_space<vmem>>, vector<64x256xbf16>
    %cst_38 = arith.constant 0.000000e+00 : bf16
    %78 = vector.broadcast %cst_38 : bf16 to vector<64x256xbf16>
    %79 = vector.shape_cast %47 : vector<1x256xi1> to vector<1x256xi1>
    %80 = vector.broadcast %79 : vector<1x256xi1> to vector<64x256xi1>
    %81 = arith.select %80, %77, %78 : vector<64x256xi1>, vector<64x256xbf16>
    %82 = tpu.concatenate %53, %54, %59, %64, %65, %70, %75, %76, %81 in 0 : vector<64x256xbf16>, vector<64x256xbf16>, vector<64x256xbf16>, vector<64x256xbf16>, vector<64x256xbf16>, vector<64x256xbf16>, vector<64x256xbf16>, vector<64x256xbf16>, vector<64x256xbf16> -> vector<576x256xbf16>
    %cst_39 = arith.constant dense<0.000000e+00> : vector<32x256xf32>
    %83 = tpu.matmul %48, %82, %cst_39 {dimension_numbers = #tpu.dot_dimension_numbers<[1], [0], [0], [1], [0, 0, 1, 1], [], []>} : vector<32x576xbf16>, vector<576x256xbf16>, vector<32x256xf32> -> vector<32x256xf32>
    %c0_40 = arith.constant 0 : index
    %c0_41 = arith.constant 0 : index
    %84 = vector.load %arg6[%c0_40, %c0_41] : memref<32x1xf32, #tpu.memory_space<vmem>>, vector<32x1xf32>
    %85 = vector.broadcast %84 : vector<32x1xf32> to vector<32x256xf32>
    %86 = arith.addf %83, %85 : vector<32x256xf32>
    %cst_42 = arith.constant 0.000000e+00 : f32
    %87 = vector.broadcast %cst_42 : f32 to vector<32x256xf32>
    %88 = arith.maximumf %86, %87 : vector<32x256xf32>
    %cst_43 = arith.constant 0.000000e+00 : bf16
    %89 = vector.broadcast %cst_43 : bf16 to vector<32x512xbf16>
    %c0_44 = arith.constant 0 : index
    %c0_45 = arith.constant 0 : index
    %90 = vector.load %arg10[%c0_44, %c0_45] : memref<32x512xbf16, #tpu.memory_space<vmem>>, vector<32x512xbf16>
    tpu.vector_store %arg10[%c0_44, %c0_45], %89 {strides = array<i32>} : memref<32x512xbf16, #tpu.memory_space<vmem>>, vector<32x512xbf16>,
    %91 = arith.truncf %88 : vector<32x256xf32> to vector<32x256xbf16>
    %c0_46 = arith.constant 0 : index
    %c128_47 = arith.constant 128 : index
    %92 = vector.load %arg10[%c0_46, %c128_47] : memref<32x512xbf16, #tpu.memory_space<vmem>>, vector<32x256xbf16>
    tpu.vector_store %arg10[%c0_46, %c128_47], %91 {strides = array<i32>} : memref<32x512xbf16, #tpu.memory_space<vmem>>, vector<32x256xbf16>,
    %c0_48 = arith.constant 0 : index
    %c0_49 = arith.constant 0 : index
    %93 = vector.load %arg4[%c0_48, %c0_49] : memref<12x288xbf16, #tpu.memory_space<vmem>>, vector<12x288xbf16>
    %c0_50 = arith.constant 0 : index
    %c111_51 = arith.constant 111 : index
    %94 = vector.load %arg10[%c0_50, %c111_51] : memref<32x512xbf16, #tpu.memory_space<vmem>>, vector<32x256xbf16>
    %cst_52 = arith.constant 0.000000e+00 : bf16
    %95 = vector.broadcast %cst_52 : bf16 to vector<32x256xbf16>
    %96 = vector.shape_cast %38 : vector<1x256xi1> to vector<1x256xi1>
    %97 = vector.broadcast %96 : vector<1x256xi1> to vector<32x256xi1>
    %98 = arith.select %97, %94, %95 : vector<32x256xi1>, vector<32x256xbf16>
    %c0_53 = arith.constant 0 : index
    %c112_54 = arith.constant 112 : index
    %99 = vector.load %arg10[%c0_53, %c112_54] : memref<32x512xbf16, #tpu.memory_space<vmem>>, vector<32x256xbf16>
    %c0_55 = arith.constant 0 : index
    %c113_56 = arith.constant 113 : index
    %100 = vector.load %arg10[%c0_55, %c113_56] : memref<32x512xbf16, #tpu.memory_space<vmem>>, vector<32x256xbf16>
    %cst_57 = arith.constant 0.000000e+00 : bf16
    %101 = vector.broadcast %cst_57 : bf16 to vector<32x256xbf16>
    %102 = vector.shape_cast %47 : vector<1x256xi1> to vector<1x256xi1>
    %103 = vector.broadcast %102 : vector<1x256xi1> to vector<32x256xi1>
    %104 = arith.select %103, %100, %101 : vector<32x256xi1>, vector<32x256xbf16>
    %c0_58 = arith.constant 0 : index
    %c127_59 = arith.constant 127 : index
    %105 = vector.load %arg10[%c0_58, %c127_59] : memref<32x512xbf16, #tpu.memory_space<vmem>>, vector<32x256xbf16>
    %cst_60 = arith.constant 0.000000e+00 : bf16
    %106 = vector.broadcast %cst_60 : bf16 to vector<32x256xbf16>
    %107 = vector.shape_cast %38 : vector<1x256xi1> to vector<1x256xi1>
    %108 = vector.broadcast %107 : vector<1x256xi1> to vector<32x256xi1>
    %109 = arith.select %108, %105, %106 : vector<32x256xi1>, vector<32x256xbf16>
    %c0_61 = arith.constant 0 : index
    %c128_62 = arith.constant 128 : index
    %110 = vector.load %arg10[%c0_61, %c128_62] : memref<32x512xbf16, #tpu.memory_space<vmem>>, vector<32x256xbf16>
    %c0_63 = arith.constant 0 : index
    %c129_64 = arith.constant 129 : index
    %111 = vector.load %arg10[%c0_63, %c129_64] : memref<32x512xbf16, #tpu.memory_space<vmem>>, vector<32x256xbf16>
    %cst_65 = arith.constant 0.000000e+00 : bf16
    %112 = vector.broadcast %cst_65 : bf16 to vector<32x256xbf16>
    %113 = vector.shape_cast %47 : vector<1x256xi1> to vector<1x256xi1>
    %114 = vector.broadcast %113 : vector<1x256xi1> to vector<32x256xi1>
    %115 = arith.select %114, %111, %112 : vector<32x256xi1>, vector<32x256xbf16>
    %c0_66 = arith.constant 0 : index
    %c143_67 = arith.constant 143 : index
    %116 = vector.load %arg10[%c0_66, %c143_67] : memref<32x512xbf16, #tpu.memory_space<vmem>>, vector<32x256xbf16>
    %cst_68 = arith.constant 0.000000e+00 : bf16
    %117 = vector.broadcast %cst_68 : bf16 to vector<32x256xbf16>
    %118 = vector.shape_cast %38 : vector<1x256xi1> to vector<1x256xi1>
    %119 = vector.broadcast %118 : vector<1x256xi1> to vector<32x256xi1>
    %120 = arith.select %119, %116, %117 : vector<32x256xi1>, vector<32x256xbf16>
    %c0_69 = arith.constant 0 : index
    %c144_70 = arith.constant 144 : index
    %121 = vector.load %arg10[%c0_69, %c144_70] : memref<32x512xbf16, #tpu.memory_space<vmem>>, vector<32x256xbf16>
    %c0_71 = arith.constant 0 : index
    %c145_72 = arith.constant 145 : index
    %122 = vector.load %arg10[%c0_71, %c145_72] : memref<32x512xbf16, #tpu.memory_space<vmem>>, vector<32x256xbf16>
    %cst_73 = arith.constant 0.000000e+00 : bf16
    %123 = vector.broadcast %cst_73 : bf16 to vector<32x256xbf16>
    %124 = vector.shape_cast %47 : vector<1x256xi1> to vector<1x256xi1>
    %125 = vector.broadcast %124 : vector<1x256xi1> to vector<32x256xi1>
    %126 = arith.select %125, %122, %123 : vector<32x256xi1>, vector<32x256xbf16>
    %127 = tpu.concatenate %98, %99, %104, %109, %110, %115, %120, %121, %126 in 0 : vector<32x256xbf16>, vector<32x256xbf16>, vector<32x256xbf16>, vector<32x256xbf16>, vector<32x256xbf16>, vector<32x256xbf16>, vector<32x256xbf16>, vector<32x256xbf16>, vector<32x256xbf16> -> vector<288x256xbf16>
    %cst_74 = arith.constant dense<0.000000e+00> : vector<12x256xf32>
    %128 = tpu.matmul %93, %127, %cst_74 {dimension_numbers = #tpu.dot_dimension_numbers<[1], [0], [0], [1], [0, 0, 1, 1], [], []>} : vector<12x288xbf16>, vector<288x256xbf16>, vector<12x256xf32> -> vector<12x256xf32>
    %c0_75 = arith.constant 0 : index
    %c0_76 = arith.constant 0 : index
    %129 = vector.load %arg7[%c0_75, %c0_76] : memref<12x1xf32, #tpu.memory_space<vmem>>, vector<12x1xf32>
    %130 = vector.broadcast %129 : vector<12x1xf32> to vector<12x256xf32>
    %131 = arith.addf %128, %130 : vector<12x256xf32>
    %c0_77 = arith.constant 0 : index
    %c0_78 = arith.constant 0 : index
    %c0_79 = arith.constant 0 : index
    %132 = vector.load %arg8[%c0_77, %c0_78, %c0_79] : memref<1x12x256xf32, #tpu.memory_space<vmem>>, vector<1x12x256xf32>
    %133 = vector.shape_cast %132 : vector<1x12x256xf32> to vector<12x256xf32>
    %134 = vector.shape_cast %131 : vector<12x256xf32> to vector<1x12x256xf32>
    tpu.vector_store %arg8[%c0_77, %c0_78, %c0_79], %134 {strides = array<i32>} : memref<1x12x256xf32, #tpu.memory_space<vmem>>, vector<1x12x256xf32>,
    return
  }
  func.func @transform_0(%arg0: i32) -> (i32, i32, i32) {
    %c0_i32 = arith.constant 0 : i32
    %c0_i32_0 = arith.constant 0 : i32
    %c0_i32_1 = arith.constant 0 : i32
    return %arg0, %c0_i32, %c0_i32_0 : i32, i32, i32
  }
  func.func @transform_1(%arg0: i32) -> (i32, i32) {
    %c0_i32 = arith.constant 0 : i32
    %c0_i32_0 = arith.constant 0 : i32
    %c0_i32_1 = arith.constant 0 : i32
    return %c0_i32, %c0_i32_0 : i32, i32
  }
  func.func @transform_2(%arg0: i32) -> (i32, i32) {
    %c0_i32 = arith.constant 0 : i32
    %c0_i32_0 = arith.constant 0 : i32
    %c0_i32_1 = arith.constant 0 : i32
    return %c0_i32, %c0_i32_0 : i32, i32
  }
  func.func @transform_3(%arg0: i32) -> (i32, i32) {
    %c0_i32 = arith.constant 0 : i32
    %c0_i32_0 = arith.constant 0 : i32
    %c0_i32_1 = arith.constant 0 : i32
    return %c0_i32, %c0_i32_0 : i32, i32
  }
  func.func @transform_4(%arg0: i32) -> (i32, i32) {
    %c0_i32 = arith.constant 0 : i32
    %c0_i32_0 = arith.constant 0 : i32
    %c0_i32_1 = arith.constant 0 : i32
    return %c0_i32, %c0_i32_0 : i32, i32
  }
  func.func @transform_5(%arg0: i32) -> (i32, i32) {
    %c0_i32 = arith.constant 0 : i32
    %c0_i32_0 = arith.constant 0 : i32
    %c0_i32_1 = arith.constant 0 : i32
    return %c0_i32, %c0_i32_0 : i32, i32
  }
  func.func @transform_6(%arg0: i32) -> (i32, i32) {
    %c0_i32 = arith.constant 0 : i32
    %c0_i32_0 = arith.constant 0 : i32
    %c0_i32_1 = arith.constant 0 : i32
    return %c0_i32, %c0_i32_0 : i32, i32
  }
  func.func @transform_7(%arg0: i32) -> (i32, i32, i32) {
    %c0_i32 = arith.constant 0 : i32
    %c0_i32_0 = arith.constant 0 : i32
    %c0_i32_1 = arith.constant 0 : i32
    return %arg0, %c0_i32, %c0_i32_0 : i32, i32, i32
  }
}

</mosaic_0001>

<llo_original>
// kernel: conv_sub_pixel_forward.1
$region0: #{conv_sub_pixel_forward.1}
  #allocation0 [shape = 'u32[]', space=smem, size = 0x4, offset = 0x4, fixed_abs, tag = 'smem constant byte address 0x4 - core index']
  #allocation1 [shape = 'u32[144,128]{1,0:T(1,128)}', space=vmem, size = 0x12000, scoped, tag = 'internal scratch']
  #allocation2 [shape = 'bf16[64,512]{1,0:T(16,128)(2,1)}', space=vmem, size = 0x10000, scoped, tag = 'scratch operand']
  #allocation3 [shape = 'bf16[32,512]{1,0:T(16,128)(2,1)}', space=vmem, size = 0x8000, scoped, tag = 'scratch operand']
  %s0 = inlined_call_operand.vmem [shape: bf16[2,75,256], index: 0, kind: input, shape index: {}]
  %s1 = inlined_call_operand.vmem [shape: bf16[64,75], index: 1, kind: input, shape index: {}]
  %s2 = inlined_call_operand.vmem [shape: bf16[32,576], index: 2, kind: input, shape index: {}]
  %s3 = inlined_call_operand.vmem [shape: bf16[12,288], index: 3, kind: input, shape index: {}]
  %s4 = inlined_call_operand.vmem [shape: f32[64,1], index: 4, kind: input, shape index: {}]
  %s5 = inlined_call_operand.vmem [shape: f32[32,1], index: 5, kind: input, shape index: {}]
  %s6 = inlined_call_operand.vmem [shape: f32[12,1], index: 6, kind: input, shape index: {}]
  %s7 = inlined_call_operand.vmem [shape: f32[2,12,256], index: 7, kind: output, shape index: {}]
  %s8 = sld [smem:[#allocation0]]
  $region61: #{conv_sub_pixel_forward.1} parent=0
    _
  %s10 = ssub.s32 1, %s8
  %s11 = scalar_select 0, %s10, %s8
  loop: start=0, step=1, limit=4
  $region2: #{conv_sub_pixel_forward.1} parent=0 // loop_pre_header
    _
  $region3: #{conv_sub_pixel_forward.1} parent=0 // loop_header
    %s13 = sphi 0, %s17
    %p14 = scmp.ge.s32.totalorder %s13, 4
    %s23 = sphi 0, %s25
    %s26 = sphi 0, %s23
    %s27 = sphi 0, %s26
    %s43 = sphi 0, %s27
    %s47 = sphi 0, %s47
    %s49 = sphi 0, %s47
    %s50 = sphi 0, %s49
    %s64 = sphi 0, %s50
    %s68 = sphi 0, %s68
    %s70 = sphi 0, %s68
    %s71 = sphi 0, %s70
    %s85 = sphi 0, %s71
    %s89 = sphi 0, %s89
    %s91 = sphi 0, %s89
    %s92 = sphi 0, %s91
    %s106 = sphi 0, %s92
    %s110 = sphi 0, %s110
    %s112 = sphi 0, %s110
    %s113 = sphi 0, %s112
    %s127 = sphi 0, %s113
    %s131 = sphi 0, %s131
    %s133 = sphi 0, %s131
    %s134 = sphi 0, %s133
    %s148 = sphi 0, %s134
    %s152 = sphi 0, %s152
    %s154 = sphi 0, %s152
    %s155 = sphi 0, %s154
    %s169 = sphi 0, %s155
    %s175 = sphi 0, %s177
    %s178 = sphi 0, %s175
    %s179 = sphi 0, %s178
    %s195 = sphi 0, %s179
  $region4: #{conv_sub_pixel_forward.1} parent=0 // loop_header_branch
    %16 = sbr.rel (%p14) target = $region8
  $region5: #{conv_sub_pixel_forward.1} parent=0 // loop_body
    %s18 = ssub.s32 %s13, 1
    %s19 = ssub.s32 %s13, 2
    %s20 = sadd.s32 %s13, 1
    %s21 = ssub.s32 %s13, %s20
    %p22 = scmp.eq.s32.totalorder %s21, 0
    %s24 = sadd.s32 %s23, 1
    %s25 = scalar_select %p22, %s23, %s24
    %p28 = pneg %p22
    %p29 = scmp.eq.s32.totalorder %s13, 1
    %p30 = por %p28, %p29
    %p31 = scmp.ne.s32.totalorder %s23, %s26
    %p32 = scmp.eq.s32.totalorder %s13, 0
    %p33 = por %p31, %p32
    %p34 = scmp.ne.s32.totalorder %s23, %s26
    %p35 = scmp.eq.s32.totalorder %s18, 1
    %p36 = por %p34, %p35
    %p37 = scmp.ne.s32.totalorder %s26, %s27
    %p38 = scmp.eq.s32.totalorder %s18, 0
    %p39 = por %p37, %p38
    %p40 = scmp.ne.s32.totalorder %s26, %s27
    %p41 = scmp.eq.s32.totalorder %s19, 1
    %p42 = por %p40, %p41
    %p44 = scmp.ne.s32.totalorder %s27, %s43
    %p45 = scmp.eq.s32.totalorder %s19, 0
    %p46 = por %p44, %p45
    %s48 = sadd.s32 %s47, 1
    %p51 = scmp.eq.s32.totalorder %s13, 1
    %p52 = scmp.ne.s32.totalorder %s47, %s49
    %p53 = scmp.eq.s32.totalorder %s13, 0
    %p54 = por %p52, %p53
    %p55 = scmp.ne.s32.totalorder %s47, %s49
    %p56 = scmp.eq.s32.totalorder %s18, 1
    %p57 = por %p55, %p56
    %p58 = scmp.ne.s32.totalorder %s49, %s50
    %p59 = scmp.eq.s32.totalorder %s18, 0
    %p60 = por %p58, %p59
    %p61 = scmp.ne.s32.totalorder %s49, %s50
    %p62 = scmp.eq.s32.totalorder %s19, 1
    %p63 = por %p61, %p62
    %p65 = scmp.ne.s32.totalorder %s50, %s64
    %p66 = scmp.eq.s32.totalorder %s19, 0
    %p67 = por %p65, %p66
    %s69 = sadd.s32 %s68, 1
    %p72 = scmp.eq.s32.totalorder %s13, 1
    %p73 = scmp.ne.s32.totalorder %s68, %s70
    %p74 = scmp.eq.s32.totalorder %s13, 0
    %p75 = por %p73, %p74
    %p76 = scmp.ne.s32.totalorder %s68, %s70
    %p77 = scmp.eq.s32.totalorder %s18, 1
    %p78 = por %p76, %p77
    %p79 = scmp.ne.s32.totalorder %s70, %s71
    %p80 = scmp.eq.s32.totalorder %s18, 0
    %p81 = por %p79, %p80
    %p82 = scmp.ne.s32.totalorder %s70, %s71
    %p83 = scmp.eq.s32.totalorder %s19, 1
    %p84 = por %p82, %p83
    %p86 = scmp.ne.s32.totalorder %s71, %s85
    %p87 = scmp.eq.s32.totalorder %s19, 0
    %p88 = por %p86, %p87
    %s90 = sadd.s32 %s89, 1
    %p93 = scmp.eq.s32.totalorder %s13, 1
    %p94 = scmp.ne.s32.totalorder %s89, %s91
    %p95 = scmp.eq.s32.totalorder %s13, 0
    %p96 = por %p94, %p95
    %p97 = scmp.ne.s32.totalorder %s89, %s91
    %p98 = scmp.eq.s32.totalorder %s18, 1
    %p99 = por %p97, %p98
    %p100 = scmp.ne.s32.totalorder %s91, %s92
    %p101 = scmp.eq.s32.totalorder %s18, 0
    %p102 = por %p100, %p101
    %p103 = scmp.ne.s32.totalorder %s91, %s92
    %p104 = scmp.eq.s32.totalorder %s19, 1
    %p105 = por %p103, %p104
    %p107 = scmp.ne.s32.totalorder %s92, %s106
    %p108 = scmp.eq.s32.totalorder %s19, 0
    %p109 = por %p107, %p108
    %s111 = sadd.s32 %s110, 1
    %p114 = scmp.eq.s32.totalorder %s13, 1
    %p115 = scmp.ne.s32.totalorder %s110, %s112
    %p116 = scmp.eq.s32.totalorder %s13, 0
    %p117 = por %p115, %p116
    %p118 = scmp.ne.s32.totalorder %s110, %s112
    %p119 = scmp.eq.s32.totalorder %s18, 1
    %p120 = por %p118, %p119
    %p121 = scmp.ne.s32.totalorder %s112, %s113
    %p122 = scmp.eq.s32.totalorder %s18, 0
    %p123 = por %p121, %p122
    %p124 = scmp.ne.s32.totalorder %s112, %s113
    %p125 = scmp.eq.s32.totalorder %s19, 1
    %p126 = por %p124, %p125
    %p128 = scmp.ne.s32.totalorder %s113, %s127
    %p129 = scmp.eq.s32.totalorder %s19, 0
    %p130 = por %p128, %p129
    %s132 = sadd.s32 %s131, 1
    %p135 = scmp.eq.s32.totalorder %s13, 1
    %p136 = scmp.ne.s32.totalorder %s131, %s133
    %p137 = scmp.eq.s32.totalorder %s13, 0
    %p138 = por %p136, %p137
    %p139 = scmp.ne.s32.totalorder %s131, %s133
    %p140 = scmp.eq.s32.totalorder %s18, 1
    %p141 = por %p139, %p140
    %p142 = scmp.ne.s32.totalorder %s133, %s134
    %p143 = scmp.eq.s32.totalorder %s18, 0
    %p144 = por %p142, %p143
    %p145 = scmp.ne.s32.totalorder %s133, %s134
    %p146 = scmp.eq.s32.totalorder %s19, 1
    %p147 = por %p145, %p146
    %p149 = scmp.ne.s32.totalorder %s134, %s148
    %p150 = scmp.eq.s32.totalorder %s19, 0
    %p151 = por %p149, %p150
    %s153 = sadd.s32 %s152, 1
    %p156 = scmp.eq.s32.totalorder %s13, 1
    %p157 = scmp.ne.s32.totalorder %s152, %s154
    %p158 = scmp.eq.s32.totalorder %s13, 0
    %p159 = por %p157, %p158
    %p160 = scmp.ne.s32.totalorder %s152, %s154
    %p161 = scmp.eq.s32.totalorder %s18, 1
    %p162 = por %p160, %p161
    %p163 = scmp.ne.s32.totalorder %s154, %s155
    %p164 = scmp.eq.s32.totalorder %s18, 0
    %p165 = por %p163, %p164
    %p166 = scmp.ne.s32.totalorder %s154, %s155
    %p167 = scmp.eq.s32.totalorder %s19, 1
    %p168 = por %p166, %p167
    %p170 = scmp.ne.s32.totalorder %s155, %s169
    %p171 = scmp.eq.s32.totalorder %s19, 0
    %p172 = por %p170, %p171
    %s173 = ssub.s32 %s13, %s20
    %p174 = scmp.eq.s32.totalorder %s173, 0
    %s176 = sadd.s32 %s175, 1
    %s177 = scalar_select %p174, %s175, %s176
    %p180 = pneg %p174
    %p181 = scmp.eq.s32.totalorder %s13, 1
    %p182 = por %p180, %p181
    %p183 = scmp.ne.s32.totalorder %s175, %s178
    %p184 = scmp.eq.s32.totalorder %s13, 0
    %p185 = por %p183, %p184
    %p186 = scmp.ne.s32.totalorder %s175, %s178
    %p187 = scmp.eq.s32.totalorder %s18, 1
    %p188 = por %p186, %p187
    %p189 = scmp.ne.s32.totalorder %s178, %s179
    %p190 = scmp.eq.s32.totalorder %s18, 0
    %p191 = por %p189, %p190
    %p192 = scmp.ne.s32.totalorder %s178, %s179
    %p193 = scmp.eq.s32.totalorder %s19, 1
    %p194 = por %p192, %p193
    %p196 = scmp.ne.s32.totalorder %s179, %s195
    %p197 = scmp.eq.s32.totalorder %s19, 0
    %p198 = por %p196, %p197
    %p199 = scmp.le.s32.totalorder 1, %s13
    %p200 = scmp.lt.s32.totalorder %s13, 3
    %p201 = pnand %p199, %p200
    %p202 = pneg %p201
    // Predicated region
    $region9: #{conv_sub_pixel_forward.1} parent=5 // pred_check
      _
    $region10: #{conv_sub_pixel_forward.1} parent=5 // pred_check_branch
      %204 = sbr.rel (%p201) target = $region12
    $region11: #{conv_sub_pixel_forward.1} parent=5 // pred_region
      %s205 = ssub.s32 %s13, 1
      // Predicated region
      $region13: #{conv_sub_pixel_forward.1} parent=11 // pred_check
        %p206 = pneg %p60
      $region14: #{conv_sub_pixel_forward.1} parent=11 // pred_check_branch
        %208 = sbr.rel (%p206) target = $region16
      $region15: #{conv_sub_pixel_forward.1} parent=11 // pred_region
        _
      $region16: #{conv_sub_pixel_forward.1} parent=11 // pred_fallthru
        _
      // Predicated region
      $region17: #{conv_sub_pixel_forward.1} parent=11 // pred_check
        %p209 = pneg %p81
      $region18: #{conv_sub_pixel_forward.1} parent=11 // pred_check_branch
        %211 = sbr.rel (%p209) target = $region20
      $region19: #{conv_sub_pixel_forward.1} parent=11 // pred_region
        _
      $region20: #{conv_sub_pixel_forward.1} parent=11 // pred_fallthru
        _
      // Predicated region
      $region21: #{conv_sub_pixel_forward.1} parent=11 // pred_check
        %p212 = pneg %p102
      $region22: #{conv_sub_pixel_forward.1} parent=11 // pred_check_branch
        %214 = sbr.rel (%p212) target = $region24
      $region23: #{conv_sub_pixel_forward.1} parent=11 // pred_region
        _
      $region24: #{conv_sub_pixel_forward.1} parent=11 // pred_fallthru
        _
      // Predicated region
      $region25: #{conv_sub_pixel_forward.1} parent=11 // pred_check
        %p215 = pneg %p123
      $region26: #{conv_sub_pixel_forward.1} parent=11 // pred_check_branch
        %217 = sbr.rel (%p215) target = $region28
      $region27: #{conv_sub_pixel_forward.1} parent=11 // pred_region
        _
      $region28: #{conv_sub_pixel_forward.1} parent=11 // pred_fallthru
        _
      // Predicated region
      $region29: #{conv_sub_pixel_forward.1} parent=11 // pred_check
        %p218 = pneg %p144
      $region30: #{conv_sub_pixel_forward.1} parent=11 // pred_check_branch
        %220 = sbr.rel (%p218) target = $region32
      $region31: #{conv_sub_pixel_forward.1} parent=11 // pred_region
        _
      $region32: #{conv_sub_pixel_forward.1} parent=11 // pred_fallthru
        _
      // Predicated region
      $region33: #{conv_sub_pixel_forward.1} parent=11 // pred_check
        %p221 = pneg %p165
      $region34: #{conv_sub_pixel_forward.1} parent=11 // pred_check_branch
        %223 = sbr.rel (%p221) target = $region36
      $region35: #{conv_sub_pixel_forward.1} parent=11 // pred_region
        _
      $region36: #{conv_sub_pixel_forward.1} parent=11 // pred_fallthru
        _
    $region12: #{conv_sub_pixel_forward.1} parent=5 // pred_fallthru
      _
    %p224 = scmp.lt.s32.totalorder %s13, 2
    // Predicated region
    $region37: #{conv_sub_pixel_forward.1} parent=5 // pred_check
      %p225 = pneg %p224
    $region38: #{conv_sub_pixel_forward.1} parent=5 // pred_check_branch
      %227 = sbr.rel (%p225) target = $region40
    $region39: #{conv_sub_pixel_forward.1} parent=5 // pred_region
      // Predicated region
      $region41: #{conv_sub_pixel_forward.1} parent=39 // pred_check
        %p228 = pneg %p33
      $region42: #{conv_sub_pixel_forward.1} parent=39 // pred_check_branch
        %230 = sbr.rel (%p228) target = $region44
      $region43: #{conv_sub_pixel_forward.1} parent=39 // pred_region
        %p231 = scmp.lt.s32.totalorder %s13, 1
        %s232 = scalar_select %p231, %s13, 1
        %s233 = smul.addr %s232, 20
        %s234 = smul.addr %s233, 4
        %s235 = scalar_lea.vmem %s0, %s234
      $region44: #{conv_sub_pixel_forward.1} parent=39 // pred_fallthru
        _
    $region40: #{conv_sub_pixel_forward.1} parent=5 // pred_fallthru
      _
    %p236 = scmp.le.s32.totalorder 1, %s13
    %p237 = scmp.lt.s32.totalorder %s13, 3
    %p238 = pnand %p236, %p237
    %p239 = pneg %p238
    // Predicated region
    $region45: #{conv_sub_pixel_forward.1} parent=5 // pred_check
      _
    $region46: #{conv_sub_pixel_forward.1} parent=5 // pred_check_branch
      %241 = sbr.rel (%p238) target = $region48
    $region47: #{conv_sub_pixel_forward.1} parent=5 // pred_region
      %s242 = ssub.s32 %s13, 1
      %p243 = scmp.lt.s32.totalorder %s18, 1
      %s244 = scalar_select %p243, %s18, 1
      %s245 = smul.addr %s244, 20
      %s246 = smul.addr %s245, 4
      %s247 = scalar_lea.vmem %s0, %s246
      %p248 = pneg %p39
      %p249 = pneg %p36
      %p250 = pneg %p60
      %p251 = pneg %p57
      %p252 = pneg %p81
      %p253 = pneg %p78
      %p254 = pneg %p102
      %p255 = pneg %p99
      %p256 = pneg %p123
      %p257 = pneg %p120
      %p258 = pneg %p144
      %p259 = pneg %p141
      %p260 = pneg %p165
      %p261 = pneg %p162
      %p262 = pneg %p191
      %p263 = pneg %p188
      %p264 = scmp.lt.s32.totalorder %s18, 1
      %s265 = scalar_select %p264, %s18, 1
      %s266 = smul.addr %s265, 4
      %s267 = smul.addr %s266, 8
      %s268 = scalar_lea.vmem %s7, %s267
      %p269 = scmp.lt.s32.totalorder %s18, 1
      %s270 = scalar_select %p269, %s18, 1
      %s271 = smul.addr %s270, 20
      %s272 = smul.addr %s271, 4
      %s273 = scalar_lea.vmem %s0, %s272
      %p274 = scmp.lt.s32.totalorder %s18, 1
      %s275 = scalar_select %p274, %s18, 1
      %s276 = smul.addr %s275, 4
      %s277 = smul.addr %s276, 8
      %s278 = scalar_lea.vmem %s7, %s277
      %v282 = vld [vmem:[%s1] sm:$0xf]
      %v283 = vld [vmem:[%s1 + $0x4] sm:$0xf]
      %v284 = vld [vmem:[%s1 + $0x8] sm:$0xf]
      %v285 = vld [vmem:[%s1 + $0xc] sm:$0xf]
      %v286 = vld [vmem:[%s1 + $0x10] sm:$0xf]
      %v287 = vld [vmem:[%s1 + $0x14] sm:$0xf]
      %v288 = vld [vmem:[%s1 + $0x18] sm:$0xf]
      %v289 = vld [vmem:[%s1 + $0x1c] sm:$0xf]
      %v290 = vld [vmem:[%s273] sm:$0xff]
      %v291 = vld [vmem:[%s273 + $0x8] sm:$0xff]
      %v292 = vld [vmem:[%s273 + $0x10] sm:$0xff]
      %v293 = vld [vmem:[%s273 + $0x18] sm:$0xff]
      %v294 = vld [vmem:[%s273 + $0x20] sm:$0xff]
      %v295 = vld [vmem:[%s273 + $0x28] sm:$0xff]
      %v296 = vld [vmem:[%s273 + $0x30] sm:$0xff]
      %v297 = vld [vmem:[%s273 + $0x38] sm:$0xff]
      %v298 = vld [vmem:[%s273 + $0x40] sm:$0xff]
      %v299 = vld [vmem:[%s273 + $0x48] sm:$0x33]
      %v300 = vld [vmem:[%s4] sm:$0xff]
      %v301 = vld [vmem:[%s4 + $0x8] sm:$0xff]
      %v302 = vld [vmem:[%s4 + $0x10] sm:$0xff]
      %v303 = vld [vmem:[%s4 + $0x18] sm:$0xff]
      %v304 = vld [vmem:[%s4 + $0x20] sm:$0xff]
      %v305 = vld [vmem:[%s4 + $0x28] sm:$0xff]
      %v306 = vld [vmem:[%s4 + $0x30] sm:$0xff]
      %v307 = vld [vmem:[%s4 + $0x38] sm:$0xff]
      %309 = vset.pattern.permute.xlu0 0
      %310 = vperm.xlu0 %309, %v300
      %v311 = vpop.permute.xlu0 %310
      %314 = vset.pattern.permute.xlu0 0
      %315 = vperm.xlu0 %314, %v301
      %v316 = vpop.permute.xlu0 %315
      %319 = vset.pattern.permute.xlu0 0
      %320 = vperm.xlu0 %319, %v302
      %v321 = vpop.permute.xlu0 %320
      %324 = vset.pattern.permute.xlu0 0
      %325 = vperm.xlu0 %324, %v303
      %v326 = vpop.permute.xlu0 %325
      %329 = vset.pattern.permute.xlu0 0
      %330 = vperm.xlu0 %329, %v304
      %v331 = vpop.permute.xlu0 %330
      %334 = vset.pattern.permute.xlu0 0
      %335 = vperm.xlu0 %334, %v305
      %v336 = vpop.permute.xlu0 %335
      %339 = vset.pattern.permute.xlu0 0
      %340 = vperm.xlu0 %339, %v306
      %v341 = vpop.permute.xlu0 %340
      %344 = vset.pattern.permute.xlu0 0
      %345 = vperm.xlu0 %344, %v307
      %v346 = vpop.permute.xlu0 %345
      %v356 = vunpack.c.l.b16 %v282
      %v357 = vunpack.c.l.b16 %v283
      %v358 = vunpack.c.l.b16 %v284
      %v359 = vunpack.c.l.b16 %v285
      %v360 = vunpack.c.l.b16 %v286
      %v361 = vunpack.c.l.b16 %v287
      %v362 = vunpack.c.l.b16 %v288
      %v363 = vunpack.c.l.b16 %v289
      %v364 = vpack.c.b16 %v357, %v356
      %v365 = vpack.c.b16 %v359, %v358
      %v366 = vpack.c.b16 %v361, %v360
      %v367 = vpack.c.b16 %v363, %v362
      %v378 = vunpack.c.l.b16 %v290
      %v379 = vunpack.c.h.b16 %v290
      %v380 = vunpack.c.l.b16 %v291
      %v381 = vunpack.c.h.b16 %v291
      %v382 = vunpack.c.l.b16 %v292
      %v383 = vunpack.c.h.b16 %v292
      %v384 = vunpack.c.l.b16 %v293
      %v385 = vunpack.c.h.b16 %v293
      %v386 = vunpack.c.l.b16 %v294
      %v387 = vunpack.c.h.b16 %v294
      %v388 = vunpack.c.l.b16 %v295
      %v389 = vunpack.c.h.b16 %v295
      %v390 = vunpack.c.l.b16 %v296
      %v391 = vunpack.c.h.b16 %v296
      %v392 = vunpack.c.l.b16 %v297
      %v393 = vunpack.c.h.b16 %v297
      %v394 = vunpack.c.l.b16 %v298
      %v395 = vunpack.c.h.b16 %v298
      %v396 = vunpack.c.l.b16 %v299
      %v397 = vunpack.c.h.b16 %v299
      %v398 = vpack.c.b16 %v380, %v378
      %v399 = vpack.c.b16 %v381, %v379
      %v400 = vpack.c.b16 %v384, %v382
      %v401 = vpack.c.b16 %v385, %v383
      %v402 = vpack.c.b16 %v388, %v386
      %v403 = vpack.c.b16 %v389, %v387
      %v404 = vpack.c.b16 %v392, %v390
      %v405 = vpack.c.b16 %v393, %v391
      %v406 = vpack.c.b16 %v396, %v394
      %v407 = vpack.c.b16 %v397, %v395
      %vm416 = vcmask 613376
      %v418 = vsel %vm416, %v364, 0
      %v421 = vsel %vm416, %v365, 0
      %v424 = vsel %vm416, %v366, 0
      %v427 = vsel %vm416, %v367, 0
      %vm429 = vcmask 1044480
      %vm430 = vcmask 1045504
      %v431 = vsel %vm429, 4294967295, 65535
      %v432 = vsel %vm430, %v431, 0
      %v434 = vand.u32 %v406, %v432
      %v437 = vand.u32 %v407, %v432
      %439 = vmatprep.subr.bf16.mxu0 %v399
      %440 = vmatpush1.bf16.msra.mxu0 %v398
      %441 = vmatprep.subr.bf16.mxu0 %v401
      %442 = vmatpush1.bf16.msra.mxu0 %v400
      %443 = vmatprep.subr.bf16.mxu0 %v403
      %444 = vmatpush1.bf16.msra.mxu0 %v402
      %445 = vmatprep.subr.bf16.mxu0 %v405
      %446 = vmatpush1.bf16.msra.mxu0 %v404
      %447 = vmatprep.subr.bf16.mxu0 %v437
      %448 = vmatpush1.bf16.msra.mxu0 %v434
      %449 = vmatprep.subr.bf16.mxu0 0
      %450 = vmatpush1.bf16.msra.mxu0 0
      %451 = vmatprep.subr.bf16.mxu0 0
      %452 = vmatpush1.bf16.msra.mxu0 0
      %453 = vmatprep.subr.bf16.mxu0 0
      %454 = vmatpush1.bf16.msra.mxu0 0
      %455 = vmatprep.subr.bf16.mxu0 0
      %456 = vmatpush1.bf16.msra.mxu0 0
      %457 = vmatprep.subr.bf16.mxu0 0
      %458 = vmatpush1.bf16.msra.mxu0 0
      %459 = vmatprep.subr.bf16.mxu0 0
      %460 = vmatpush1.bf16.msra.mxu0 0
      %461 = vmatprep.subr.bf16.mxu0 0
      %462 = vmatpush1.bf16.msra.mxu0 0
      %463 = vmatprep.subr.bf16.mxu0 0
      %464 = vmatpush1.bf16.msra.mxu0 0
      %465 = vmatprep.subr.bf16.mxu0 0
      %466 = vmatpush1.bf16.msra.mxu0 0
      %467 = vmatprep.subr.bf16.mxu0 0
      %468 = vmatpush1.bf16.msra.mxu0 0
      %469 = vmatprep.subr.bf16.mxu0 0
      %470 = vmatpush1.bf16.msra.mxu0 0
      %471 = vmatprep.mubr.bf16.mxu0 0
      %472 = vmatmul.mubr.bf16.gmra.mrb[0].mxu0 %v418
      %v473 = vpop.f32.mrb[0].mxu0
      %v474 = vadd.f32 %v311, %v473
      %v475 = vpop.f32.mrb[0].mxu0
      %v476 = vadd.f32 %v311, %v475
      %v477 = vpop.f32.mrb[0].mxu0
      %v478 = vadd.f32 %v316, %v477
      %v479 = vpop.f32.mrb[0].mxu0
      %v480 = vadd.f32 %v316, %v479
      %481 = vmatprep.mubr.bf16.mxu0 0
      %482 = vmatmul.mubr.bf16.gmra.mrb[0].mxu0 %v421
      %v483 = vpop.f32.mrb[0].mxu0
      %v484 = vadd.f32 %v321, %v483
      %v485 = vpop.f32.mrb[0].mxu0
      %v486 = vadd.f32 %v321, %v485
      %v487 = vpop.f32.mrb[0].mxu0
      %v488 = vadd.f32 %v326, %v487
      %v489 = vpop.f32.mrb[0].mxu0
      %v490 = vadd.f32 %v326, %v489
      %491 = vmatprep.mubr.bf16.mxu0 0
      %492 = vmatmul.mubr.bf16.gmra.mrb[0].mxu0 %v424
      %v493 = vpop.f32.mrb[0].mxu0
      %v494 = vadd.f32 %v331, %v493
      %v495 = vpop.f32.mrb[0].mxu0
      %v496 = vadd.f32 %v331, %v495
      %v497 = vpop.f32.mrb[0].mxu0
      %v498 = vadd.f32 %v336, %v497
      %v499 = vpop.f32.mrb[0].mxu0
      %v500 = vadd.f32 %v336, %v499
      %501 = vmatprep.mubr.bf16.mxu0 0
      %502 = vmatmul.mubr.bf16.gmra.mrb[0].mxu0 %v427
      %v503 = vpop.f32.mrb[0].mxu0
      %v504 = vadd.f32 %v341, %v503
      %v505 = vpop.f32.mrb[0].mxu0
      %v506 = vadd.f32 %v341, %v505
      %v507 = vpop.f32.mrb[0].mxu0
      %v508 = vadd.f32 %v346, %v507
      %v509 = vpop.f32.mrb[0].mxu0
      %v510 = vadd.f32 %v346, %v509
      %511 = vdwg.mxu0
      %v512 = vmax.f32 %v474, 0.0
      %v513 = vmax.f32 %v476, 0.0
      %v514 = vmax.f32 %v478, 0.0
      %v515 = vmax.f32 %v480, 0.0
      %v516 = vmax.f32 %v484, 0.0
      %v517 = vmax.f32 %v486, 0.0
      %v518 = vmax.f32 %v488, 0.0
      %v519 = vmax.f32 %v490, 0.0
      %v520 = vmax.f32 %v494, 0.0
      %v521 = vmax.f32 %v496, 0.0
      %v522 = vmax.f32 %v498, 0.0
      %v523 = vmax.f32 %v500, 0.0
      %v524 = vmax.f32 %v504, 0.0
      %v525 = vmax.f32 %v506, 0.0
      %v526 = vmax.f32 %v508, 0.0
      %v527 = vmax.f32 %v510, 0.0
      %528 = vst [vmem:[#allocation2] sm:$0xff] 0
      %529 = vst [vmem:[#allocation2 + $0x8] sm:$0xff] 0
      %530 = vst [vmem:[#allocation2 + $0x10] sm:$0xff] 0
      %531 = vst [vmem:[#allocation2 + $0x18] sm:$0xff] 0
      %532 = vst [vmem:[#allocation2 + $0x20] sm:$0xff] 0
      %533 = vst [vmem:[#allocation2 + $0x28] sm:$0xff] 0
      %534 = vst [vmem:[#allocation2 + $0x30] sm:$0xff] 0
      %535 = vst [vmem:[#allocation2 + $0x38] sm:$0xff] 0
      %536 = vst [vmem:[#allocation2 + $0x40] sm:$0xff] 0
      %537 = vst [vmem:[#allocation2 + $0x48] sm:$0xff] 0
      %538 = vst [vmem:[#allocation2 + $0x50] sm:$0xff] 0
      %539 = vst [vmem:[#allocation2 + $0x58] sm:$0xff] 0
      %540 = vst [vmem:[#allocation2 + $0x60] sm:$0xff] 0
      %541 = vst [vmem:[#allocation2 + $0x68] sm:$0xff] 0
      %542 = vst [vmem:[#allocation2 + $0x70] sm:$0xff] 0
      %543 = vst [vmem:[#allocation2 + $0x78] sm:$0xff] 0
      %v544 = vpack.c.bf16 %v514, %v512
      %v545 = vpack.c.bf16 %v515, %v513
      %v546 = vpack.c.bf16 %v518, %v516
      %v547 = vpack.c.bf16 %v519, %v517
      %v548 = vpack.c.bf16 %v522, %v520
      %v549 = vpack.c.bf16 %v523, %v521
      %v550 = vpack.c.bf16 %v526, %v524
      %v551 = vpack.c.bf16 %v527, %v525
      %552 = vst [vmem:[#allocation2 + $0x8] sm:$0xff] %v544
      %553 = vst [vmem:[#allocation2 + $0x10] sm:$0xff] %v545
      %554 = vst [vmem:[#allocation2 + $0x28] sm:$0xff] %v546
      %555 = vst [vmem:[#allocation2 + $0x30] sm:$0xff] %v547
      %556 = vst [vmem:[#allocation2 + $0x48] sm:$0xff] %v548
      %557 = vst [vmem:[#allocation2 + $0x50] sm:$0xff] %v549
      %558 = vst [vmem:[#allocation2 + $0x68] sm:$0xff] %v550
      %559 = vst [vmem:[#allocation2 + $0x70] sm:$0xff] %v551
      %v560 = vlaneseq
      %v561 = vand.u32 %v560, 127
      %v562 = vadd.s32 %v561, 128
      %vm563 = vcmp.lt.s32.totalorder %v561, 0
      %v564 = vsub.s32 0, %v561
      %v565 = vsel %vm563, %v564, %v561
      %v566 = vshrl.u32 %v565, 4
      %v567 = vand.u32 %v565, 15
      %v568 = vsub.s32 0, %v567
      %v569 = vsel %vm563, %v568, %v567
      %vm570 = vcmp.lt.s32.totalorder %v562, 0
      %v571 = vsub.s32 0, %v562
      %v572 = vsel %vm570, %v571, %v562
      %v573 = vshrl.u32 %v572, 4
      %v574 = vand.u32 %v572, 15
      %v575 = vsub.s32 0, %v574
      %v576 = vsel %vm570, %v575, %v574
      %vm577 = vcmp.ne.s32.totalorder %v569, 0
      %vm578 = vcmp.ne.s32.totalorder %v576, 0
      %vm579 = vcmp.lt.s32.totalorder %v569, 0
      %vm580 = vcmp.lt.s32.totalorder %v576, 0
      %vm581 = vmand %vm579, %vm577
      %vm582 = vmand %vm580, %vm578
      %v583 = vadd.s32 %v569, 16
      %v584 = vadd.s32 %v576, 16
      %v585 = vsel %vm581, %v583, %v569
      %v586 = vsel %vm582, %v584, %v576
      %v587 = vadd.s32 %v585, 4294967295
      %v588 = vadd.s32 %v586, 4294967295
      %vm589 = vcmp.ge.s32.totalorder %v587, 0
      %vm590 = vcmp.ge.s32.totalorder %v588, 0
      %vm591 = vcmp.lt.s32.totalorder %v587, 16
      %vm592 = vcmp.lt.s32.totalorder %v588, 16
      %vm593 = vmand %vm589, %vm591
      %vm594 = vmand %vm590, %vm592
      %v595 = vadd.s32 %v585, 1
      %v596 = vadd.s32 %v586, 1
      %vm597 = vcmp.ge.s32.totalorder %v595, 0
      %vm598 = vcmp.ge.s32.totalorder %v596, 0
      %vm599 = vcmp.lt.s32.totalorder %v595, 16
      %vm600 = vcmp.lt.s32.totalorder %v596, 16
      %vm601 = vmand %vm597, %vm599
      %vm602 = vmand %vm598, %vm600
      %v603 = vld [vmem:[%s2] sm:$0xff]
      %v604 = vld [vmem:[%s2 + $0x8] sm:$0xff]
      %v605 = vld [vmem:[%s2 + $0x10] sm:$0xf]
      %v606 = vld [vmem:[%s2 + $0x14] sm:$0xff]
      %v607 = vld [vmem:[%s2 + $0x1c] sm:$0xff]
      %v608 = vld [vmem:[%s2 + $0x24] sm:$0xf]
      %v609 = vld [vmem:[%s2 + $0x28] sm:$0xff]
      %v610 = vld [vmem:[%s2 + $0x30] sm:$0xff]
      %v611 = vld [vmem:[%s2 + $0x38] sm:$0xf]
      %v612 = vld [vmem:[%s2 + $0x3c] sm:$0xff]
      %v613 = vld [vmem:[%s2 + $0x44] sm:$0xff]
      %v614 = vld [vmem:[%s2 + $0x4c] sm:$0xf]
      %v615 = vld [vmem:[#allocation2] sm:$0xff]
      %v616 = vld [vmem:[#allocation2 + $0x8] sm:$0xff]
      %v617 = vld [vmem:[#allocation2 + $0x10] sm:$0xff]
      %v618 = vld [vmem:[#allocation2 + $0x20] sm:$0xff]
      %v619 = vld [vmem:[#allocation2 + $0x28] sm:$0xff]
      %v620 = vld [vmem:[#allocation2 + $0x30] sm:$0xff]
      %v621 = vld [vmem:[#allocation2 + $0x40] sm:$0xff]
      %v622 = vld [vmem:[#allocation2 + $0x48] sm:$0xff]
      %v623 = vld [vmem:[#allocation2 + $0x50] sm:$0xff]
      %v624 = vld [vmem:[#allocation2 + $0x60] sm:$0xff]
      %v625 = vld [vmem:[#allocation2 + $0x68] sm:$0xff]
      %v626 = vld [vmem:[#allocation2 + $0x70] sm:$0xff]
      %v627 = vsel %vm593, 1, 0
      %v628 = vsel %vm594, 1, 0
      %vm629 = vcmp.eq.s32.totalorder %v627, 1
      %vm630 = vcmp.eq.s32.totalorder %v628, 1
      %vm631 = vmpackc.low %vm630, %vm629
      %v632 = vsel %vm631, 65537, 0
      %v633 = vlaneseq
      %v634 = vshrl.u32 %v633, 7
      %v635 = vsub.s32 0, %v634
      %v636 = vrot.slane %v632, %v635
      %v637 = vlaneseq
      %v638 = vshrl.u32 %v637, 7
      %v639 = vsub.s32 4, %v638
      %v640 = vrot.slane %v632, %v639
      %641 = vrot.lane.b32.xlu0 %v636, 111
      %v642 = vpop.permute.xlu0 %641
      %643 = vrot.lane.b32.xlu0 %v640, 111
      %v644 = vpop.permute.xlu0 %643
      %vm645 = vcmask 908288
      %v646 = vsel %vm645, %v642, %v644
      %vm647 = vcmp.ne.s16.totalorder %v642, 0
      %vm648 = vcmp.ne.s16.totalorder %v646, 0
      %vm649 = vcmp.ne.s16.totalorder %v644, 0
      %v650 = vsel %vm647, %v615, 0
      %v651 = vsel %vm648, %v616, 0
      %v652 = vsel %vm649, %v617, 0
      %v653 = vsel %vm647, %v618, 0
      %v654 = vsel %vm648, %v619, 0
      %v655 = vsel %vm649, %v620, 0
      %v656 = vsel %vm647, %v621, 0
      %v657 = vsel %vm648, %v622, 0
      %v658 = vsel %vm649, %v623, 0
      %v659 = vsel %vm647, %v624, 0
      %v660 = vsel %vm648, %v625, 0
      %v661 = vsel %vm649, %v626, 0
      %v662 = vsel %vm601, 1, 0
      %v663 = vsel %vm602, 1, 0
      %vm664 = vcmp.eq.s32.totalorder %v662, 1
      %vm665 = vcmp.eq.s32.totalorder %v663, 1
      %vm666 = vmpackc.low %vm665, %vm664
      %v667 = vsel %vm666, 65537, 0
      %v668 = vlaneseq
      %v669 = vshrl.u32 %v668, 7
      %v670 = vsub.s32 0, %v669
      %v671 = vrot.slane %v667, %v670
      %v672 = vlaneseq
      %v673 = vshrl.u32 %v672, 7
      %v674 = vsub.s32 4, %v673
      %v675 = vrot.slane %v667, %v674
      %676 = vrot.lane.b32.xlu0 %v671, 113
      %v677 = vpop.permute.xlu0 %676
      %678 = vrot.lane.b32.xlu0 %v675, 113
      %v679 = vpop.permute.xlu0 %678
      %vm680 = vcmask 924672
      %v681 = vsel %vm680, %v677, %v679
      %vm682 = vcmp.ne.s16.totalorder %v677, 0
      %vm683 = vcmp.ne.s16.totalorder %v681, 0
      %vm684 = vcmp.ne.s16.totalorder %v679, 0
      %v685 = vsel %vm682, %v615, 0
      %v686 = vsel %vm683, %v616, 0
      %v687 = vsel %vm684, %v617, 0
      %v688 = vsel %vm682, %v618, 0
      %v689 = vsel %vm683, %v619, 0
      %v690 = vsel %vm684, %v620, 0
      %v691 = vsel %vm682, %v621, 0
      %v692 = vsel %vm683, %v622, 0
      %v693 = vsel %vm684, %v623, 0
      %v694 = vsel %vm682, %v624, 0
      %v695 = vsel %vm683, %v625, 0
      %v696 = vsel %vm684, %v626, 0
      %697 = vrot.lane.b32.xlu0 %v636, 127
      %v698 = vpop.permute.xlu0 %697
      %699 = vrot.lane.b32.xlu0 %v640, 127
      %v700 = vpop.permute.xlu0 %699
      %vm701 = vcmask 1039360
      %v702 = vsel %vm701, %v698, %v700
      %vm703 = vcmp.ne.s16.totalorder %v698, 0
      %vm704 = vcmp.ne.s16.totalorder %v702, 0
      %vm705 = vcmp.ne.s16.totalorder %v700, 0
      %v706 = vsel %vm703, %v615, 0
      %v707 = vsel %vm704, %v616, 0
      %v708 = vsel %vm705, %v617, 0
      %v709 = vsel %vm703, %v618, 0
      %v710 = vsel %vm704, %v619, 0
      %v711 = vsel %vm705, %v620, 0
      %v712 = vsel %vm703, %v621, 0
      %v713 = vsel %vm704, %v622, 0
      %v714 = vsel %vm705, %v623, 0
      %v715 = vsel %vm703, %v624, 0
      %v716 = vsel %vm704, %v625, 0
      %v717 = vsel %vm705, %v626, 0
      %v718 = vld [vmem:[#allocation2 + $0x8] sm:$0xff]
      %v719 = vld [vmem:[#allocation2 + $0x10] sm:$0xff]
      %v720 = vld [vmem:[#allocation2 + $0x18] sm:$0xff]
      %v721 = vld [vmem:[#allocation2 + $0x28] sm:$0xff]
      %v722 = vld [vmem:[#allocation2 + $0x30] sm:$0xff]
      %v723 = vld [vmem:[#allocation2 + $0x38] sm:$0xff]
      %v724 = vld [vmem:[#allocation2 + $0x48] sm:$0xff]
      %v725 = vld [vmem:[#allocation2 + $0x50] sm:$0xff]
      %v726 = vld [vmem:[#allocation2 + $0x58] sm:$0xff]
      %v727 = vld [vmem:[#allocation2 + $0x68] sm:$0xff]
      %v728 = vld [vmem:[#allocation2 + $0x70] sm:$0xff]
      %v729 = vld [vmem:[#allocation2 + $0x78] sm:$0xff]
      %730 = vrot.lane.b32.xlu0 %v671, 1
      %v731 = vpop.permute.xlu0 %730
      %732 = vrot.lane.b32.xlu0 %v675, 1
      %v733 = vpop.permute.xlu0 %732
      %vm734 = vcmask 7168
      %v735 = vsel %vm734, %v731, %v733
      %vm736 = vcmp.ne.s16.totalorder %v731, 0
      %vm737 = vcmp.ne.s16.totalorder %v735, 0
      %vm738 = vcmp.ne.s16.totalorder %v733, 0
      %v739 = vsel %vm736, %v718, 0
      %v740 = vsel %vm737, %v719, 0
      %v741 = vsel %vm738, %v720, 0
      %v742 = vsel %vm736, %v721, 0
      %v743 = vsel %vm737, %v722, 0
      %v744 = vsel %vm738, %v723, 0
      %v745 = vsel %vm736, %v724, 0
      %v746 = vsel %vm737, %v725, 0
      %v747 = vsel %vm738, %v726, 0
      %v748 = vsel %vm736, %v727, 0
      %v749 = vsel %vm737, %v728, 0
      %v750 = vsel %vm738, %v729, 0
      %751 = vrot.lane.b32.xlu0 %v636, 15
      %v752 = vpop.permute.xlu0 %751
      %753 = vrot.lane.b32.xlu0 %v640, 15
      %v754 = vpop.permute.xlu0 %753
      %vm755 = vcmask 121856
      %v756 = vsel %vm755, %v752, %v754
      %vm757 = vcmp.ne.s16.totalorder %v752, 0
      %vm758 = vcmp.ne.s16.totalorder %v756, 0
      %vm759 = vcmp.ne.s16.totalorder %v754, 0
      %v760 = vsel %vm757, %v718, 0
      %v761 = vsel %vm758, %v719, 0
      %v762 = vsel %vm759, %v720, 0
      %v763 = vsel %vm757, %v721, 0
      %v764 = vsel %vm758, %v722, 0
      %v765 = vsel %vm759, %v723, 0
      %v766 = vsel %vm757, %v724, 0
      %v767 = vsel %vm758, %v725, 0
      %v768 = vsel %vm759, %v726, 0
      %v769 = vsel %vm757, %v727, 0
      %v770 = vsel %vm758, %v728, 0
      %v771 = vsel %vm759, %v729, 0
      %772 = vrot.lane.b32.xlu0 %v671, 17
      %v773 = vpop.permute.xlu0 %772
      %774 = vrot.lane.b32.xlu0 %v675, 17
      %v775 = vpop.permute.xlu0 %774
      %vm776 = vcmask 138240
      %v777 = vsel %vm776, %v773, %v775
      %vm778 = vcmp.ne.s16.totalorder %v773, 0
      %vm779 = vcmp.ne.s16.totalorder %v777, 0
      %vm780 = vcmp.ne.s16.totalorder %v775, 0
      %v781 = vsel %vm778, %v718, 0
      %v782 = vsel %vm779, %v719, 0
      %v783 = vsel %vm780, %v720, 0
      %v784 = vsel %vm778, %v721, 0
      %v785 = vsel %vm779, %v722, 0
      %v786 = vsel %vm780, %v723, 0
      %v787 = vsel %vm778, %v724, 0
      %v788 = vsel %vm779, %v725, 0
      %v789 = vsel %vm780, %v726, 0
      %v790 = vsel %vm778, %v727, 0
      %v791 = vsel %vm779, %v728, 0
      %v792 = vsel %vm780, %v729, 0
      %805 = vrot.lane.b32.xlu0 %v615, 127
      %v806 = vpop.permute.xlu0 %805
      %807 = vrot.lane.b32.xlu0 %v616, 127
      %v808 = vpop.permute.xlu0 %807
      %809 = vrot.lane.b32.xlu0 %v617, 127
      %v810 = vpop.permute.xlu0 %809
      %811 = vrot.lane.b32.xlu0 %v618, 127
      %v812 = vpop.permute.xlu0 %811
      %813 = vrot.lane.b32.xlu0 %v619, 127
      %v814 = vpop.permute.xlu0 %813
      %815 = vrot.lane.b32.xlu0 %v620, 127
      %v816 = vpop.permute.xlu0 %815
      %817 = vrot.lane.b32.xlu0 %v621, 127
      %v818 = vpop.permute.xlu0 %817
      %819 = vrot.lane.b32.xlu0 %v622, 127
      %v820 = vpop.permute.xlu0 %819
      %821 = vrot.lane.b32.xlu0 %v623, 127
      %v822 = vpop.permute.xlu0 %821
      %823 = vrot.lane.b32.xlu0 %v624, 127
      %v824 = vpop.permute.xlu0 %823
      %825 = vrot.lane.b32.xlu0 %v625, 127
      %v826 = vpop.permute.xlu0 %825
      %827 = vrot.lane.b32.xlu0 %v626, 127
      %v828 = vpop.permute.xlu0 %827
      %v829 = vsel %vm701, %v806, %v808
      %v830 = vsel %vm701, %v808, %v810
      %v831 = vsel %vm701, %v812, %v814
      %v832 = vsel %vm701, %v814, %v816
      %v833 = vsel %vm701, %v818, %v820
      %v834 = vsel %vm701, %v820, %v822
      %v835 = vsel %vm701, %v824, %v826
      %v836 = vsel %vm701, %v826, %v828
      %849 = vrot.lane.b32.xlu0 %v685, 126
      %v850 = vpop.permute.xlu0 %849
      %851 = vrot.lane.b32.xlu0 %v686, 126
      %v852 = vpop.permute.xlu0 %851
      %853 = vrot.lane.b32.xlu0 %v687, 126
      %v854 = vpop.permute.xlu0 %853
      %855 = vrot.lane.b32.xlu0 %v688, 126
      %v856 = vpop.permute.xlu0 %855
      %857 = vrot.lane.b32.xlu0 %v689, 126
      %v858 = vpop.permute.xlu0 %857
      %859 = vrot.lane.b32.xlu0 %v690, 126
      %v860 = vpop.permute.xlu0 %859
      %861 = vrot.lane.b32.xlu0 %v691, 126
      %v862 = vpop.permute.xlu0 %861
      %863 = vrot.lane.b32.xlu0 %v692, 126
      %v864 = vpop.permute.xlu0 %863
      %865 = vrot.lane.b32.xlu0 %v693, 126
      %v866 = vpop.permute.xlu0 %865
      %867 = vrot.lane.b32.xlu0 %v694, 126
      %v868 = vpop.permute.xlu0 %867
      %869 = vrot.lane.b32.xlu0 %v695, 126
      %v870 = vpop.permute.xlu0 %869
      %871 = vrot.lane.b32.xlu0 %v696, 126
      %v872 = vpop.permute.xlu0 %871
      %vm873 = vcmask 1031168
      %v874 = vsel %vm873, %v850, %v852
      %v875 = vsel %vm873, %v852, %v854
      %v876 = vsel %vm873, %v856, %v858
      %v877 = vsel %vm873, %v858, %v860
      %v878 = vsel %vm873, %v862, %v864
      %v879 = vsel %vm873, %v864, %v866
      %v880 = vsel %vm873, %v868, %v870
      %v881 = vsel %vm873, %v870, %v872
      %894 = vrot.lane.b32.xlu0 %v706, 112
      %v895 = vpop.permute.xlu0 %894
      %896 = vrot.lane.b32.xlu0 %v707, 112
      %v897 = vpop.permute.xlu0 %896
      %898 = vrot.lane.b32.xlu0 %v708, 112
      %v899 = vpop.permute.xlu0 %898
      %900 = vrot.lane.b32.xlu0 %v709, 112
      %v901 = vpop.permute.xlu0 %900
      %902 = vrot.lane.b32.xlu0 %v710, 112
      %v903 = vpop.permute.xlu0 %902
      %904 = vrot.lane.b32.xlu0 %v711, 112
      %v905 = vpop.permute.xlu0 %904
      %906 = vrot.lane.b32.xlu0 %v712, 112
      %v907 = vpop.permute.xlu0 %906
      %908 = vrot.lane.b32.xlu0 %v713, 112
      %v909 = vpop.permute.xlu0 %908
      %910 = vrot.lane.b32.xlu0 %v714, 112
      %v911 = vpop.permute.xlu0 %910
      %912 = vrot.lane.b32.xlu0 %v715, 112
      %v913 = vpop.permute.xlu0 %912
      %914 = vrot.lane.b32.xlu0 %v716, 112
      %v915 = vpop.permute.xlu0 %914
      %916 = vrot.lane.b32.xlu0 %v717, 112
      %v917 = vpop.permute.xlu0 %916
      %vm918 = vcmask 916480
      %v919 = vsel %vm918, %v895, %v897
      %v920 = vsel %vm918, %v897, %v899
      %v921 = vsel %vm918, %v901, %v903
      %v922 = vsel %vm918, %v903, %v905
      %v923 = vsel %vm918, %v907, %v909
      %v924 = vsel %vm918, %v909, %v911
      %v925 = vsel %vm918, %v913, %v915
      %v926 = vsel %vm918, %v915, %v917
      %927 = vrot.lane.b32.xlu0 %v616, 111
      %v928 = vpop.permute.xlu0 %927
      %929 = vrot.lane.b32.xlu0 %v617, 111
      %v930 = vpop.permute.xlu0 %929
      %931 = vrot.lane.b32.xlu0 %v619, 111
      %v932 = vpop.permute.xlu0 %931
      %933 = vrot.lane.b32.xlu0 %v620, 111
      %v934 = vpop.permute.xlu0 %933
      %935 = vrot.lane.b32.xlu0 %v622, 111
      %v936 = vpop.permute.xlu0 %935
      %937 = vrot.lane.b32.xlu0 %v623, 111
      %v938 = vpop.permute.xlu0 %937
      %939 = vrot.lane.b32.xlu0 %v625, 111
      %v940 = vpop.permute.xlu0 %939
      %941 = vrot.lane.b32.xlu0 %v626, 111
      %v942 = vpop.permute.xlu0 %941
      %v943 = vsel %vm645, %v928, %v930
      %v944 = vsel %vm645, %v932, %v934
      %v945 = vsel %vm645, %v936, %v938
      %v946 = vsel %vm645, %v940, %v942
      %959 = vrot.lane.b32.xlu0 %v739, 110
      %v960 = vpop.permute.xlu0 %959
      %961 = vrot.lane.b32.xlu0 %v740, 110
      %v962 = vpop.permute.xlu0 %961
      %963 = vrot.lane.b32.xlu0 %v741, 110
      %v964 = vpop.permute.xlu0 %963
      %965 = vrot.lane.b32.xlu0 %v742, 110
      %v966 = vpop.permute.xlu0 %965
      %967 = vrot.lane.b32.xlu0 %v743, 110
      %v968 = vpop.permute.xlu0 %967
      %969 = vrot.lane.b32.xlu0 %v744, 110
      %v970 = vpop.permute.xlu0 %969
      %971 = vrot.lane.b32.xlu0 %v745, 110
      %v972 = vpop.permute.xlu0 %971
      %973 = vrot.lane.b32.xlu0 %v746, 110
      %v974 = vpop.permute.xlu0 %973
      %975 = vrot.lane.b32.xlu0 %v747, 110
      %v976 = vpop.permute.xlu0 %975
      %977 = vrot.lane.b32.xlu0 %v748, 110
      %v978 = vpop.permute.xlu0 %977
      %979 = vrot.lane.b32.xlu0 %v749, 110
      %v980 = vpop.permute.xlu0 %979
      %981 = vrot.lane.b32.xlu0 %v750, 110
      %v982 = vpop.permute.xlu0 %981
      %vm983 = vcmask 900096
      %v984 = vsel %vm983, %v960, %v962
      %v985 = vsel %vm983, %v962, %v964
      %v986 = vsel %vm983, %v966, %v968
      %v987 = vsel %vm983, %v968, %v970
      %v988 = vsel %vm983, %v972, %v974
      %v989 = vsel %vm983, %v974, %v976
      %v990 = vsel %vm983, %v978, %v980
      %v991 = vsel %vm983, %v980, %v982
      %1004 = vrot.lane.b32.xlu0 %v760, 96
      %v1005 = vpop.permute.xlu0 %1004
      %1006 = vrot.lane.b32.xlu0 %v761, 96
      %v1007 = vpop.permute.xlu0 %1006
      %1008 = vrot.lane.b32.xlu0 %v762, 96
      %v1009 = vpop.permute.xlu0 %1008
      %1010 = vrot.lane.b32.xlu0 %v763, 96
      %v1011 = vpop.permute.xlu0 %1010
      %1012 = vrot.lane.b32.xlu0 %v764, 96
      %v1013 = vpop.permute.xlu0 %1012
      %1014 = vrot.lane.b32.xlu0 %v765, 96
      %v1015 = vpop.permute.xlu0 %1014
      %1016 = vrot.lane.b32.xlu0 %v766, 96
      %v1017 = vpop.permute.xlu0 %1016
      %1018 = vrot.lane.b32.xlu0 %v767, 96
      %v1019 = vpop.permute.xlu0 %1018
      %1020 = vrot.lane.b32.xlu0 %v768, 96
      %v1021 = vpop.permute.xlu0 %1020
      %1022 = vrot.lane.b32.xlu0 %v769, 96
      %v1023 = vpop.permute.xlu0 %1022
      %1024 = vrot.lane.b32.xlu0 %v770, 96
      %v1025 = vpop.permute.xlu0 %1024
      %1026 = vrot.lane.b32.xlu0 %v771, 96
      %v1027 = vpop.permute.xlu0 %1026
      %vm1028 = vcmask 785408
      %v1029 = vsel %vm1028, %v1005, %v1007
      %v1030 = vsel %vm1028, %v1007, %v1009
      %v1031 = vsel %vm1028, %v1011, %v1013
      %v1032 = vsel %vm1028, %v1013, %v1015
      %v1033 = vsel %vm1028, %v1017, %v1019
      %v1034 = vsel %vm1028, %v1019, %v1021
      %v1035 = vsel %vm1028, %v1023, %v1025
      %v1036 = vsel %vm1028, %v1025, %v1027
      %1049 = vrot.lane.b32.xlu0 %v718, 95
      %v1050 = vpop.permute.xlu0 %1049
      %1051 = vrot.lane.b32.xlu0 %v719, 95
      %v1052 = vpop.permute.xlu0 %1051
      %1053 = vrot.lane.b32.xlu0 %v720, 95
      %v1054 = vpop.permute.xlu0 %1053
      %1055 = vrot.lane.b32.xlu0 %v721, 95
      %v1056 = vpop.permute.xlu0 %1055
      %1057 = vrot.lane.b32.xlu0 %v722, 95
      %v1058 = vpop.permute.xlu0 %1057
      %1059 = vrot.lane.b32.xlu0 %v723, 95
      %v1060 = vpop.permute.xlu0 %1059
      %1061 = vrot.lane.b32.xlu0 %v724, 95
      %v1062 = vpop.permute.xlu0 %1061
      %1063 = vrot.lane.b32.xlu0 %v725, 95
      %v1064 = vpop.permute.xlu0 %1063
      %1065 = vrot.lane.b32.xlu0 %v726, 95
      %v1066 = vpop.permute.xlu0 %1065
      %1067 = vrot.lane.b32.xlu0 %v727, 95
      %v1068 = vpop.permute.xlu0 %1067
      %1069 = vrot.lane.b32.xlu0 %v728, 95
      %v1070 = vpop.permute.xlu0 %1069
      %1071 = vrot.lane.b32.xlu0 %v729, 95
      %v1072 = vpop.permute.xlu0 %1071
      %vm1073 = vcmask 777216
      %v1074 = vsel %vm1073, %v1050, %v1052
      %v1075 = vsel %vm1073, %v1052, %v1054
      %v1076 = vsel %vm1073, %v1056, %v1058
      %v1077 = vsel %vm1073, %v1058, %v1060
      %v1078 = vsel %vm1073, %v1062, %v1064
      %v1079 = vsel %vm1073, %v1064, %v1066
      %v1080 = vsel %vm1073, %v1068, %v1070
      %v1081 = vsel %vm1073, %v1070, %v1072
      %1094 = vrot.lane.b32.xlu0 %v781, 94
      %v1095 = vpop.permute.xlu0 %1094
      %1096 = vrot.lane.b32.xlu0 %v782, 94
      %v1097 = vpop.permute.xlu0 %1096
      %1098 = vrot.lane.b32.xlu0 %v783, 94
      %v1099 = vpop.permute.xlu0 %1098
      %1100 = vrot.lane.b32.xlu0 %v784, 94
      %v1101 = vpop.permute.xlu0 %1100
      %1102 = vrot.lane.b32.xlu0 %v785, 94
      %v1103 = vpop.permute.xlu0 %1102
      %1104 = vrot.lane.b32.xlu0 %v786, 94
      %v1105 = vpop.permute.xlu0 %1104
      %1106 = vrot.lane.b32.xlu0 %v787, 94
      %v1107 = vpop.permute.xlu0 %1106
      %1108 = vrot.lane.b32.xlu0 %v788, 94
      %v1109 = vpop.permute.xlu0 %1108
      %1110 = vrot.lane.b32.xlu0 %v789, 94
      %v1111 = vpop.permute.xlu0 %1110
      %1112 = vrot.lane.b32.xlu0 %v790, 94
      %v1113 = vpop.permute.xlu0 %1112
      %1114 = vrot.lane.b32.xlu0 %v791, 94
      %v1115 = vpop.permute.xlu0 %1114
      %1116 = vrot.lane.b32.xlu0 %v792, 94
      %v1117 = vpop.permute.xlu0 %1116
      %vm1118 = vcmask 769024
      %v1119 = vsel %vm1118, %v1095, %v1097
      %v1120 = vsel %vm1118, %v1097, %v1099
      %v1121 = vsel %vm1118, %v1101, %v1103
      %v1122 = vsel %vm1118, %v1103, %v1105
      %v1123 = vsel %vm1118, %v1107, %v1109
      %v1124 = vsel %vm1118, %v1109, %v1111
      %v1125 = vsel %vm1118, %v1113, %v1115
      %v1126 = vsel %vm1118, %v1115, %v1117
      %v1127 = vld [vmem:[%s5] sm:$0xff]
      %v1128 = vld [vmem:[%s5 + $0x8] sm:$0xff]
      %v1129 = vld [vmem:[%s5 + $0x10] sm:$0xff]
      %v1130 = vld [vmem:[%s5 + $0x18] sm:$0xff]
      %1132 = vset.pattern.permute.xlu0 0
      %1133 = vperm.xlu0 %1132, %v1127
      %v1134 = vpop.permute.xlu0 %1133
      %1137 = vset.pattern.permute.xlu0 0
      %1138 = vperm.xlu0 %1137, %v1128
      %v1139 = vpop.permute.xlu0 %1138
      %1142 = vset.pattern.permute.xlu0 0
      %1143 = vperm.xlu0 %1142, %v1129
      %v1144 = vpop.permute.xlu0 %1143
      %1147 = vset.pattern.permute.xlu0 0
      %1148 = vperm.xlu0 %1147, %v1130
      %v1149 = vpop.permute.xlu0 %1148
      %v1163 = vunpack.c.l.b16 %v603
      %v1164 = vunpack.c.h.b16 %v603
      %v1165 = vunpack.c.l.b16 %v604
      %v1166 = vunpack.c.h.b16 %v604
      %v1167 = vunpack.c.l.b16 %v605
      %v1168 = vunpack.c.l.b16 %v606
      %v1169 = vunpack.c.h.b16 %v606
      %v1170 = vunpack.c.l.b16 %v607
      %v1171 = vunpack.c.h.b16 %v607
      %v1172 = vunpack.c.l.b16 %v608
      %v1173 = vunpack.c.l.b16 %v609
      %v1174 = vunpack.c.h.b16 %v609
      %v1175 = vunpack.c.l.b16 %v610
      %v1176 = vunpack.c.h.b16 %v610
      %v1177 = vunpack.c.l.b16 %v611
      %v1178 = vunpack.c.l.b16 %v612
      %v1179 = vunpack.c.h.b16 %v612
      %v1180 = vunpack.c.l.b16 %v613
      %v1181 = vunpack.c.h.b16 %v613
      %v1182 = vunpack.c.l.b16 %v614
      %v1183 = vpack.c.b16 %v1168, %v1163
      %v1184 = vpack.c.b16 %v1169, %v1164
      %v1185 = vpack.c.b16 %v1170, %v1165
      %v1186 = vpack.c.b16 %v1171, %v1166
      %v1187 = vpack.c.b16 %v1172, %v1167
      %v1188 = vpack.c.b16 %v1178, %v1173
      %v1189 = vpack.c.b16 %v1179, %v1174
      %v1190 = vpack.c.b16 %v1180, %v1175
      %v1191 = vpack.c.b16 %v1181, %v1176
      %v1192 = vpack.c.b16 %v1182, %v1177
      %1213 = vrot.lane.b32.xlu0 %v650, 17
      %v1214 = vpop.permute.xlu0 %1213
      %1215 = vrot.lane.b32.xlu0 %v651, 17
      %v1216 = vpop.permute.xlu0 %1215
      %1217 = vrot.lane.b32.xlu0 %v652, 17
      %v1218 = vpop.permute.xlu0 %1217
      %1219 = vrot.lane.b32.xlu0 %v653, 17
      %v1220 = vpop.permute.xlu0 %1219
      %1221 = vrot.lane.b32.xlu0 %v654, 17
      %v1222 = vpop.permute.xlu0 %1221
      %1223 = vrot.lane.b32.xlu0 %v655, 17
      %v1224 = vpop.permute.xlu0 %1223
      %1225 = vrot.lane.b32.xlu0 %v656, 17
      %v1226 = vpop.permute.xlu0 %1225
      %1227 = vrot.lane.b32.xlu0 %v657, 17
      %v1228 = vpop.permute.xlu0 %1227
      %1229 = vrot.lane.b32.xlu0 %v658, 17
      %v1230 = vpop.permute.xlu0 %1229
      %1231 = vrot.lane.b32.xlu0 %v659, 17
      %v1232 = vpop.permute.xlu0 %1231
      %1233 = vrot.lane.b32.xlu0 %v660, 17
      %v1234 = vpop.permute.xlu0 %1233
      %1235 = vrot.lane.b32.xlu0 %v661, 17
      %v1236 = vpop.permute.xlu0 %1235
      %1237 = vrot.lane.b32.xlu0 %v829, 17
      %v1238 = vpop.permute.xlu0 %1237
      %1239 = vrot.lane.b32.xlu0 %v830, 17
      %v1240 = vpop.permute.xlu0 %1239
      %1241 = vrot.lane.b32.xlu0 %v810, 17
      %v1242 = vpop.permute.xlu0 %1241
      %1243 = vrot.lane.b32.xlu0 %v831, 17
      %v1244 = vpop.permute.xlu0 %1243
      %1245 = vrot.lane.b32.xlu0 %v832, 17
      %v1246 = vpop.permute.xlu0 %1245
      %1247 = vrot.lane.b32.xlu0 %v816, 17
      %v1248 = vpop.permute.xlu0 %1247
      %1249 = vrot.lane.b32.xlu0 %v833, 17
      %v1250 = vpop.permute.xlu0 %1249
      %1251 = vrot.lane.b32.xlu0 %v834, 17
      %v1252 = vpop.permute.xlu0 %1251
      %1253 = vrot.lane.b32.xlu0 %v822, 17
      %v1254 = vpop.permute.xlu0 %1253
      %1255 = vrot.lane.b32.xlu0 %v835, 17
      %v1256 = vpop.permute.xlu0 %1255
      %1257 = vrot.lane.b32.xlu0 %v836, 17
      %v1258 = vpop.permute.xlu0 %1257
      %1259 = vrot.lane.b32.xlu0 %v828, 17
      %v1260 = vpop.permute.xlu0 %1259
      %1261 = vrot.lane.b32.xlu0 %v874, 17
      %v1262 = vpop.permute.xlu0 %1261
      %1263 = vrot.lane.b32.xlu0 %v875, 17
      %v1264 = vpop.permute.xlu0 %1263
      %1265 = vrot.lane.b32.xlu0 %v854, 17
      %v1266 = vpop.permute.xlu0 %1265
      %1267 = vrot.lane.b32.xlu0 %v876, 17
      %v1268 = vpop.permute.xlu0 %1267
      %1269 = vrot.lane.b32.xlu0 %v877, 17
      %v1270 = vpop.permute.xlu0 %1269
      %1271 = vrot.lane.b32.xlu0 %v860, 17
      %v1272 = vpop.permute.xlu0 %1271
      %1273 = vrot.lane.b32.xlu0 %v878, 17
      %v1274 = vpop.permute.xlu0 %1273
      %1275 = vrot.lane.b32.xlu0 %v879, 17
      %v1276 = vpop.permute.xlu0 %1275
      %1277 = vrot.lane.b32.xlu0 %v866, 17
      %v1278 = vpop.permute.xlu0 %1277
      %1279 = vrot.lane.b32.xlu0 %v880, 17
      %v1280 = vpop.permute.xlu0 %1279
      %1281 = vrot.lane.b32.xlu0 %v881, 17
      %v1282 = vpop.permute.xlu0 %1281
      %1283 = vrot.lane.b32.xlu0 %v872, 17
      %v1284 = vpop.permute.xlu0 %1283
      %1285 = vrot.lane.b32.xlu0 %v919, 17
      %v1286 = vpop.permute.xlu0 %1285
      %1287 = vrot.lane.b32.xlu0 %v920, 17
      %v1288 = vpop.permute.xlu0 %1287
      %1289 = vrot.lane.b32.xlu0 %v899, 17
      %v1290 = vpop.permute.xlu0 %1289
      %1291 = vrot.lane.b32.xlu0 %v921, 17
      %v1292 = vpop.permute.xlu0 %1291
      %1293 = vrot.lane.b32.xlu0 %v922, 17
      %v1294 = vpop.permute.xlu0 %1293
      %1295 = vrot.lane.b32.xlu0 %v905, 17
      %v1296 = vpop.permute.xlu0 %1295
      %1297 = vrot.lane.b32.xlu0 %v923, 17
      %v1298 = vpop.permute.xlu0 %1297
      %1299 = vrot.lane.b32.xlu0 %v924, 17
      %v1300 = vpop.permute.xlu0 %1299
      %1301 = vrot.lane.b32.xlu0 %v911, 17
      %v1302 = vpop.permute.xlu0 %1301
      %1303 = vrot.lane.b32.xlu0 %v925, 17
      %v1304 = vpop.permute.xlu0 %1303
      %1305 = vrot.lane.b32.xlu0 %v926, 17
      %v1306 = vpop.permute.xlu0 %1305
      %1307 = vrot.lane.b32.xlu0 %v917, 17
      %v1308 = vpop.permute.xlu0 %1307
      %1309 = vrot.lane.b32.xlu0 %v928, 17
      %v1310 = vpop.permute.xlu0 %1309
      %1311 = vrot.lane.b32.xlu0 %v943, 17
      %v1312 = vpop.permute.xlu0 %1311
      %1313 = vrot.lane.b32.xlu0 %v930, 17
      %v1314 = vpop.permute.xlu0 %1313
      %1315 = vrot.lane.b32.xlu0 %v932, 17
      %v1316 = vpop.permute.xlu0 %1315
      %1317 = vrot.lane.b32.xlu0 %v944, 17
      %v1318 = vpop.permute.xlu0 %1317
      %1319 = vrot.lane.b32.xlu0 %v934, 17
      %v1320 = vpop.permute.xlu0 %1319
      %1321 = vrot.lane.b32.xlu0 %v936, 17
      %v1322 = vpop.permute.xlu0 %1321
      %1323 = vrot.lane.b32.xlu0 %v945, 17
      %v1324 = vpop.permute.xlu0 %1323
      %1325 = vrot.lane.b32.xlu0 %v938, 17
      %v1326 = vpop.permute.xlu0 %1325
      %1327 = vrot.lane.b32.xlu0 %v940, 17
      %v1328 = vpop.permute.xlu0 %1327
      %1329 = vrot.lane.b32.xlu0 %v946, 17
      %v1330 = vpop.permute.xlu0 %1329
      %1331 = vrot.lane.b32.xlu0 %v942, 17
      %v1332 = vpop.permute.xlu0 %1331
      %1333 = vrot.lane.b32.xlu0 %v960, 17
      %v1334 = vpop.permute.xlu0 %1333
      %1335 = vrot.lane.b32.xlu0 %v984, 17
      %v1336 = vpop.permute.xlu0 %1335
      %1337 = vrot.lane.b32.xlu0 %v985, 17
      %v1338 = vpop.permute.xlu0 %1337
      %1339 = vrot.lane.b32.xlu0 %v966, 17
      %v1340 = vpop.permute.xlu0 %1339
      %1341 = vrot.lane.b32.xlu0 %v986, 17
      %v1342 = vpop.permute.xlu0 %1341
      %1343 = vrot.lane.b32.xlu0 %v987, 17
      %v1344 = vpop.permute.xlu0 %1343
      %1345 = vrot.lane.b32.xlu0 %v972, 17
      %v1346 = vpop.permute.xlu0 %1345
      %1347 = vrot.lane.b32.xlu0 %v988, 17
      %v1348 = vpop.permute.xlu0 %1347
      %1349 = vrot.lane.b32.xlu0 %v989, 17
      %v1350 = vpop.permute.xlu0 %1349
      %1351 = vrot.lane.b32.xlu0 %v978, 17
      %v1352 = vpop.permute.xlu0 %1351
      %1353 = vrot.lane.b32.xlu0 %v990, 17
      %v1354 = vpop.permute.xlu0 %1353
      %1355 = vrot.lane.b32.xlu0 %v991, 17
      %v1356 = vpop.permute.xlu0 %1355
      %1357 = vrot.lane.b32.xlu0 %v1005, 17
      %v1358 = vpop.permute.xlu0 %1357
      %1359 = vrot.lane.b32.xlu0 %v1029, 17
      %v1360 = vpop.permute.xlu0 %1359
      %1361 = vrot.lane.b32.xlu0 %v1030, 17
      %v1362 = vpop.permute.xlu0 %1361
      %1363 = vrot.lane.b32.xlu0 %v1011, 17
      %v1364 = vpop.permute.xlu0 %1363
      %1365 = vrot.lane.b32.xlu0 %v1031, 17
      %v1366 = vpop.permute.xlu0 %1365
      %1367 = vrot.lane.b32.xlu0 %v1032, 17
      %v1368 = vpop.permute.xlu0 %1367
      %1369 = vrot.lane.b32.xlu0 %v1017, 17
      %v1370 = vpop.permute.xlu0 %1369
      %1371 = vrot.lane.b32.xlu0 %v1033, 17
      %v1372 = vpop.permute.xlu0 %1371
      %1373 = vrot.lane.b32.xlu0 %v1034, 17
      %v1374 = vpop.permute.xlu0 %1373
      %1375 = vrot.lane.b32.xlu0 %v1023, 17
      %v1376 = vpop.permute.xlu0 %1375
      %1377 = vrot.lane.b32.xlu0 %v1035, 17
      %v1378 = vpop.permute.xlu0 %1377
      %1379 = vrot.lane.b32.xlu0 %v1036, 17
      %v1380 = vpop.permute.xlu0 %1379
      %1381 = vrot.lane.b32.xlu0 %v1050, 17
      %v1382 = vpop.permute.xlu0 %1381
      %1383 = vrot.lane.b32.xlu0 %v1074, 17
      %v1384 = vpop.permute.xlu0 %1383
      %1385 = vrot.lane.b32.xlu0 %v1075, 17
      %v1386 = vpop.permute.xlu0 %1385
      %1387 = vrot.lane.b32.xlu0 %v1056, 17
      %v1388 = vpop.permute.xlu0 %1387
      %1389 = vrot.lane.b32.xlu0 %v1076, 17
      %v1390 = vpop.permute.xlu0 %1389
      %1391 = vrot.lane.b32.xlu0 %v1077, 17
      %v1392 = vpop.permute.xlu0 %1391
      %1393 = vrot.lane.b32.xlu0 %v1062, 17
      %v1394 = vpop.permute.xlu0 %1393
      %1395 = vrot.lane.b32.xlu0 %v1078, 17
      %v1396 = vpop.permute.xlu0 %1395
      %1397 = vrot.lane.b32.xlu0 %v1079, 17
      %v1398 = vpop.permute.xlu0 %1397
      %1399 = vrot.lane.b32.xlu0 %v1068, 17
      %v1400 = vpop.permute.xlu0 %1399
      %1401 = vrot.lane.b32.xlu0 %v1080, 17
      %v1402 = vpop.permute.xlu0 %1401
      %1403 = vrot.lane.b32.xlu0 %v1081, 17
      %v1404 = vpop.permute.xlu0 %1403
      %1405 = vrot.lane.b32.xlu0 %v1095, 17
      %v1406 = vpop.permute.xlu0 %1405
      %1407 = vrot.lane.b32.xlu0 %v1119, 17
      %v1408 = vpop.permute.xlu0 %1407
      %1409 = vrot.lane.b32.xlu0 %v1120, 17
      %v1410 = vpop.permute.xlu0 %1409
      %1411 = vrot.lane.b32.xlu0 %v1101, 17
      %v1412 = vpop.permute.xlu0 %1411
      %1413 = vrot.lane.b32.xlu0 %v1121, 17
      %v1414 = vpop.permute.xlu0 %1413
      %1415 = vrot.lane.b32.xlu0 %v1122, 17
      %v1416 = vpop.permute.xlu0 %1415
      %1417 = vrot.lane.b32.xlu0 %v1107, 17
      %v1418 = vpop.permute.xlu0 %1417
      %1419 = vrot.lane.b32.xlu0 %v1123, 17
      %v1420 = vpop.permute.xlu0 %1419
      %1421 = vrot.lane.b32.xlu0 %v1124, 17
      %v1422 = vpop.permute.xlu0 %1421
      %1423 = vrot.lane.b32.xlu0 %v1113, 17
      %v1424 = vpop.permute.xlu0 %1423
      %1425 = vrot.lane.b32.xlu0 %v1125, 17
      %v1426 = vpop.permute.xlu0 %1425
      %1427 = vrot.lane.b32.xlu0 %v1126, 17
      %v1428 = vpop.permute.xlu0 %1427
      %v1429 = vsel %vm776, %v1214, %v1216
      %v1430 = vsel %vm776, %v1216, %v1218
      %v1431 = vsel %vm776, %v1220, %v1222
      %v1432 = vsel %vm776, %v1222, %v1224
      %v1433 = vsel %vm776, %v1226, %v1228
      %v1434 = vsel %vm776, %v1228, %v1230
      %v1435 = vsel %vm776, %v1232, %v1234
      %v1436 = vsel %vm776, %v1234, %v1236
      %v1437 = vsel %vm776, %v1238, %v1240
      %v1438 = vsel %vm776, %v1240, %v1242
      %v1439 = vsel %vm776, %v1244, %v1246
      %v1440 = vsel %vm776, %v1246, %v1248
      %v1441 = vsel %vm776, %v1250, %v1252
      %v1442 = vsel %vm776, %v1252, %v1254
      %v1443 = vsel %vm776, %v1256, %v1258
      %v1444 = vsel %vm776, %v1258, %v1260
      %v1445 = vsel %vm776, %v1262, %v1264
      %v1446 = vsel %vm776, %v1264, %v1266
      %v1447 = vsel %vm776, %v1268, %v1270
      %v1448 = vsel %vm776, %v1270, %v1272
      %v1449 = vsel %vm776, %v1274, %v1276
      %v1450 = vsel %vm776, %v1276, %v1278
      %v1451 = vsel %vm776, %v1280, %v1282
      %v1452 = vsel %vm776, %v1282, %v1284
      %v1453 = vsel %vm776, %v1286, %v1288
      %v1454 = vsel %vm776, %v1288, %v1290
      %v1455 = vsel %vm776, %v1292, %v1294
      %v1456 = vsel %vm776, %v1294, %v1296
      %v1457 = vsel %vm776, %v1298, %v1300
      %v1458 = vsel %vm776, %v1300, %v1302
      %v1459 = vsel %vm776, %v1304, %v1306
      %v1460 = vsel %vm776, %v1306, %v1308
      %v1461 = vsel %vm776, %v1310, %v1312
      %v1462 = vsel %vm776, %v1312, %v1314
      %v1463 = vsel %vm776, %v1316, %v1318
      %v1464 = vsel %vm776, %v1318, %v1320
      %v1465 = vsel %vm776, %v1322, %v1324
      %v1466 = vsel %vm776, %v1324, %v1326
      %v1467 = vsel %vm776, %v1328, %v1330
      %v1468 = vsel %vm776, %v1330, %v1332
      %v1469 = vsel %vm776, %v1334, %v1336
      %v1470 = vsel %vm776, %v1336, %v1338
      %v1471 = vsel %vm776, %v1340, %v1342
      %v1472 = vsel %vm776, %v1342, %v1344
      %v1473 = vsel %vm776, %v1346, %v1348
      %v1474 = vsel %vm776, %v1348, %v1350
      %v1475 = vsel %vm776, %v1352, %v1354
      %v1476 = vsel %vm776, %v1354, %v1356
      %v1477 = vsel %vm776, %v1358, %v1360
      %v1478 = vsel %vm776, %v1360, %v1362
      %v1479 = vsel %vm776, %v1364, %v1366
      %v1480 = vsel %vm776, %v1366, %v1368
      %v1481 = vsel %vm776, %v1370, %v1372
      %v1482 = vsel %vm776, %v1372, %v1374
      %v1483 = vsel %vm776, %v1376, %v1378
      %v1484 = vsel %vm776, %v1378, %v1380
      %v1485 = vsel %vm776, %v1382, %v1384
      %v1486 = vsel %vm776, %v1384, %v1386
      %v1487 = vsel %vm776, %v1388, %v1390
      %v1488 = vsel %vm776, %v1390, %v1392
      %v1489 = vsel %vm776, %v1394, %v1396
      %v1490 = vsel %vm776, %v1396, %v1398
      %v1491 = vsel %vm776, %v1400, %v1402
      %v1492 = vsel %vm776, %v1402, %v1404
      %v1493 = vsel %vm776, %v1406, %v1408
      %v1494 = vsel %vm776, %v1408, %v1410
      %v1495 = vsel %vm776, %v1412, %v1414
      %v1496 = vsel %vm776, %v1414, %v1416
      %v1497 = vsel %vm776, %v1418, %v1420
      %v1498 = vsel %vm776, %v1420, %v1422
      %v1499 = vsel %vm776, %v1424, %v1426
      %v1500 = vsel %vm776, %v1426, %v1428
      %vm1573 = vcmask 523264
      %v1575 = vsel %vm1573, %v1187, 0
      %v1578 = vsel %vm1573, %v1192, 0
      %1580 = vmatprep.subr.bf16.mxu0 %v1430
      %1581 = vmatpush1.bf16.msra.mxu0 %v1429
      %1582 = vmatprep.subr.bf16.mxu0 %v1432
      %1583 = vmatpush1.bf16.msra.mxu0 %v1431
      %1584 = vmatprep.subr.bf16.mxu0 %v1434
      %1585 = vmatpush1.bf16.msra.mxu0 %v1433
      %1586 = vmatprep.subr.bf16.mxu0 %v1436
      %1587 = vmatpush1.bf16.msra.mxu0 %v1435
      %1588 = vmatprep.subr.bf16.mxu0 %v1438
      %1589 = vmatpush1.bf16.msra.mxu0 %v1437
      %1590 = vmatprep.subr.bf16.mxu0 %v1440
      %1591 = vmatpush1.bf16.msra.mxu0 %v1439
      %1592 = vmatprep.subr.bf16.mxu0 %v1442
      %1593 = vmatpush1.bf16.msra.mxu0 %v1441
      %1594 = vmatprep.subr.bf16.mxu0 %v1444
      %1595 = vmatpush1.bf16.msra.mxu0 %v1443
      %1596 = vmatprep.subr.bf16.mxu0 %v1446
      %1597 = vmatpush1.bf16.msra.mxu0 %v1445
      %1598 = vmatprep.subr.bf16.mxu0 %v1448
      %1599 = vmatpush1.bf16.msra.mxu0 %v1447
      %1600 = vmatprep.subr.bf16.mxu0 %v1450
      %1601 = vmatpush1.bf16.msra.mxu0 %v1449
      %1602 = vmatprep.subr.bf16.mxu0 %v1452
      %1603 = vmatpush1.bf16.msra.mxu0 %v1451
      %1604 = vmatprep.subr.bf16.mxu0 %v1454
      %1605 = vmatpush1.bf16.msra.mxu0 %v1453
      %1606 = vmatprep.subr.bf16.mxu0 %v1456
      %1607 = vmatpush1.bf16.msra.mxu0 %v1455
      %1608 = vmatprep.subr.bf16.mxu0 %v1458
      %1609 = vmatpush1.bf16.msra.mxu0 %v1457
      %1610 = vmatprep.subr.bf16.mxu0 %v1460
      %1611 = vmatpush1.bf16.msra.mxu0 %v1459
      %1612 = vmatprep.mubr.bf16.mxu0 %v1184
      %1613 = vmatmul.mubr.bf16.gmra.mrb[0].mxu0 %v1183
      %v1614 = vpop.f32.mrb[0].mxu0
      %v1615 = vadd.f32 %v1134, %v1614
      %v1616 = vpop.f32.mrb[0].mxu0
      %v1617 = vadd.f32 %v1134, %v1616
      %v1618 = vpop.f32.mrb[0].mxu0
      %v1619 = vadd.f32 %v1139, %v1618
      %v1620 = vpop.f32.mrb[0].mxu0
      %v1621 = vadd.f32 %v1139, %v1620
      %1622 = vmatprep.mubr.bf16.mxu0 %v1189
      %1623 = vmatmul.mubr.bf16.gmra.mrb[0].mxu0 %v1188
      %v1624 = vpop.f32.mrb[0].mxu0
      %v1625 = vadd.f32 %v1144, %v1624
      %v1626 = vpop.f32.mrb[0].mxu0
      %v1627 = vadd.f32 %v1144, %v1626
      %v1628 = vpop.f32.mrb[0].mxu0
      %v1629 = vadd.f32 %v1149, %v1628
      %v1630 = vpop.f32.mrb[0].mxu0
      %v1631 = vadd.f32 %v1149, %v1630
      %1632 = vdwg.mxu0
      %1633 = vmatprep.subr.bf16.mxu0 %v1462
      %1634 = vmatpush1.bf16.msra.mxu0 %v1461
      %1635 = vmatprep.subr.bf16.mxu0 %v1464
      %1636 = vmatpush1.bf16.msra.mxu0 %v1463
      %1637 = vmatprep.subr.bf16.mxu0 %v1466
      %1638 = vmatpush1.bf16.msra.mxu0 %v1465
      %1639 = vmatprep.subr.bf16.mxu0 %v1468
      %1640 = vmatpush1.bf16.msra.mxu0 %v1467
      %1641 = vmatprep.subr.bf16.mxu0 %v1470
      %1642 = vmatpush1.bf16.msra.mxu0 %v1469
      %1643 = vmatprep.subr.bf16.mxu0 %v1472
      %1644 = vmatpush1.bf16.msra.mxu0 %v1471
      %1645 = vmatprep.subr.bf16.mxu0 %v1474
      %1646 = vmatpush1.bf16.msra.mxu0 %v1473
      %1647 = vmatprep.subr.bf16.mxu0 %v1476
      %1648 = vmatpush1.bf16.msra.mxu0 %v1475
      %1649 = vmatprep.subr.bf16.mxu0 %v1478
      %1650 = vmatpush1.bf16.msra.mxu0 %v1477
      %1651 = vmatprep.subr.bf16.mxu0 %v1480
      %1652 = vmatpush1.bf16.msra.mxu0 %v1479
      %1653 = vmatprep.subr.bf16.mxu0 %v1482
      %1654 = vmatpush1.bf16.msra.mxu0 %v1481
      %1655 = vmatprep.subr.bf16.mxu0 %v1484
      %1656 = vmatpush1.bf16.msra.mxu0 %v1483
      %1657 = vmatprep.subr.bf16.mxu0 %v1486
      %1658 = vmatpush1.bf16.msra.mxu0 %v1485
      %1659 = vmatprep.subr.bf16.mxu0 %v1488
      %1660 = vmatpush1.bf16.msra.mxu0 %v1487
      %1661 = vmatprep.subr.bf16.mxu0 %v1490
      %1662 = vmatpush1.bf16.msra.mxu0 %v1489
      %1663 = vmatprep.subr.bf16.mxu0 %v1492
      %1664 = vmatpush1.bf16.msra.mxu0 %v1491
      %1665 = vmatprep.mubr.bf16.mxu0 %v1186
      %1666 = vmatmul.mubr.bf16.gmra.mrb[0].mxu0 %v1185
      %v1667 = vpop.f32.mrb[0].mxu0
      %v1668 = vadd.f32 %v1615, %v1667
      %v1669 = vpop.f32.mrb[0].mxu0
      %v1670 = vadd.f32 %v1617, %v1669
      %v1671 = vpop.f32.mrb[0].mxu0
      %v1672 = vadd.f32 %v1619, %v1671
      %v1673 = vpop.f32.mrb[0].mxu0
      %v1674 = vadd.f32 %v1621, %v1673
      %1675 = vmatprep.mubr.bf16.mxu0 %v1191
      %1676 = vmatmul.mubr.bf16.gmra.mrb[0].mxu0 %v1190
      %v1677 = vpop.f32.mrb[0].mxu0
      %v1678 = vadd.f32 %v1625, %v1677
      %v1679 = vpop.f32.mrb[0].mxu0
      %v1680 = vadd.f32 %v1627, %v1679
      %v1681 = vpop.f32.mrb[0].mxu0
      %v1682 = vadd.f32 %v1629, %v1681
      %v1683 = vpop.f32.mrb[0].mxu0
      %v1684 = vadd.f32 %v1631, %v1683
      %1685 = vdwg.mxu0
      %1686 = vmatprep.subr.bf16.mxu0 %v1494
      %1687 = vmatpush1.bf16.msra.mxu0 %v1493
      %1688 = vmatprep.subr.bf16.mxu0 %v1496
      %1689 = vmatpush1.bf16.msra.mxu0 %v1495
      %1690 = vmatprep.subr.bf16.mxu0 %v1498
      %1691 = vmatpush1.bf16.msra.mxu0 %v1497
      %1692 = vmatprep.subr.bf16.mxu0 %v1500
      %1693 = vmatpush1.bf16.msra.mxu0 %v1499
      %1694 = vmatprep.subr.bf16.mxu0 0
      %1695 = vmatpush1.bf16.msra.mxu0 0
      %1696 = vmatprep.subr.bf16.mxu0 0
      %1697 = vmatpush1.bf16.msra.mxu0 0
      %1698 = vmatprep.subr.bf16.mxu0 0
      %1699 = vmatpush1.bf16.msra.mxu0 0
      %1700 = vmatprep.subr.bf16.mxu0 0
      %1701 = vmatpush1.bf16.msra.mxu0 0
      %1702 = vmatprep.subr.bf16.mxu0 0
      %1703 = vmatpush1.bf16.msra.mxu0 0
      %1704 = vmatprep.subr.bf16.mxu0 0
      %1705 = vmatpush1.bf16.msra.mxu0 0
      %1706 = vmatprep.subr.bf16.mxu0 0
      %1707 = vmatpush1.bf16.msra.mxu0 0
      %1708 = vmatprep.subr.bf16.mxu0 0
      %1709 = vmatpush1.bf16.msra.mxu0 0
      %1710 = vmatprep.subr.bf16.mxu0 0
      %1711 = vmatpush1.bf16.msra.mxu0 0
      %1712 = vmatprep.subr.bf16.mxu0 0
      %1713 = vmatpush1.bf16.msra.mxu0 0
      %1714 = vmatprep.subr.bf16.mxu0 0
      %1715 = vmatpush1.bf16.msra.mxu0 0
      %1716 = vmatprep.subr.bf16.mxu0 0
      %1717 = vmatpush1.bf16.msra.mxu0 0
      %1718 = vmatprep.mubr.bf16.mxu0 0
      %1719 = vmatmul.mubr.bf16.gmra.mrb[0].mxu0 %v1575
      %v1720 = vpop.f32.mrb[0].mxu0
      %v1721 = vadd.f32 %v1668, %v1720
      %v1722 = vpop.f32.mrb[0].mxu0
      %v1723 = vadd.f32 %v1670, %v1722
      %v1724 = vpop.f32.mrb[0].mxu0
      %v1725 = vadd.f32 %v1672, %v1724
      %v1726 = vpop.f32.mrb[0].mxu0
      %v1727 = vadd.f32 %v1674, %v1726
      %1728 = vmatprep.mubr.bf16.mxu0 0
      %1729 = vmatmul.mubr.bf16.gmra.mrb[0].mxu0 %v1578
      %v1730 = vpop.f32.mrb[0].mxu0
      %v1731 = vadd.f32 %v1678, %v1730
      %v1732 = vpop.f32.mrb[0].mxu0
      %v1733 = vadd.f32 %v1680, %v1732
      %v1734 = vpop.f32.mrb[0].mxu0
      %v1735 = vadd.f32 %v1682, %v1734
      %v1736 = vpop.f32.mrb[0].mxu0
      %v1737 = vadd.f32 %v1684, %v1736
      %1738 = vdwg.mxu0
      %v1739 = vmax.f32 %v1721, 0.0
      %v1740 = vmax.f32 %v1723, 0.0
      %v1741 = vmax.f32 %v1725, 0.0
      %v1742 = vmax.f32 %v1727, 0.0
      %v1743 = vmax.f32 %v1731, 0.0
      %v1744 = vmax.f32 %v1733, 0.0
      %v1745 = vmax.f32 %v1735, 0.0
      %v1746 = vmax.f32 %v1737, 0.0
      %1747 = vst [vmem:[#allocation3] sm:$0xff] 0
      %1748 = vst [vmem:[#allocation3 + $0x8] sm:$0xff] 0
      %1749 = vst [vmem:[#allocation3 + $0x10] sm:$0xff] 0
      %1750 = vst [vmem:[#allocation3 + $0x18] sm:$0xff] 0
      %1751 = vst [vmem:[#allocation3 + $0x20] sm:$0xff] 0
      %1752 = vst [vmem:[#allocation3 + $0x28] sm:$0xff] 0
      %1753 = vst [vmem:[#allocation3 + $0x30] sm:$0xff] 0
      %1754 = vst [vmem:[#allocation3 + $0x38] sm:$0xff] 0
      %v1755 = vpack.c.bf16 %v1741, %v1739
      %v1756 = vpack.c.bf16 %v1742, %v1740
      %v1757 = vpack.c.bf16 %v1745, %v1743
      %v1758 = vpack.c.bf16 %v1746, %v1744
      %1759 = vst [vmem:[#allocation3 + $0x8] sm:$0xff] %v1755
      %1760 = vst [vmem:[#allocation3 + $0x10] sm:$0xff] %v1756
      %1761 = vst [vmem:[#allocation3 + $0x28] sm:$0xff] %v1757
      %1762 = vst [vmem:[#allocation3 + $0x30] sm:$0xff] %v1758
      %v1763 = vld [vmem:[%s3] sm:$0xff]
      %v1764 = vld [vmem:[%s3 + $0x8] sm:$0xf]
      %v1765 = vld [vmem:[%s3 + $0xc] sm:$0x33]
      %v1766 = vld [vmem:[%s3 + $0x14] sm:$0x3]
      %v1767 = vld [vmem:[#allocation3] sm:$0xff]
      %v1768 = vld [vmem:[#allocation3 + $0x8] sm:$0xff]
      %v1769 = vld [vmem:[#allocation3 + $0x10] sm:$0xff]
      %v1770 = vld [vmem:[#allocation3 + $0x20] sm:$0xff]
      %v1771 = vld [vmem:[#allocation3 + $0x28] sm:$0xff]
      %v1772 = vld [vmem:[#allocation3 + $0x30] sm:$0xff]
      %v1773 = vsel %vm647, %v1767, 0
      %v1774 = vsel %vm648, %v1768, 0
      %v1775 = vsel %vm649, %v1769, 0
      %v1776 = vsel %vm647, %v1770, 0
      %v1777 = vsel %vm648, %v1771, 0
      %v1778 = vsel %vm649, %v1772, 0
      %v1779 = vsel %vm682, %v1767, 0
      %v1780 = vsel %vm683, %v1768, 0
      %v1781 = vsel %vm684, %v1769, 0
      %v1782 = vsel %vm682, %v1770, 0
      %v1783 = vsel %vm683, %v1771, 0
      %v1784 = vsel %vm684, %v1772, 0
      %v1785 = vsel %vm703, %v1767, 0
      %v1786 = vsel %vm704, %v1768, 0
      %v1787 = vsel %vm705, %v1769, 0
      %v1788 = vsel %vm703, %v1770, 0
      %v1789 = vsel %vm704, %v1771, 0
      %v1790 = vsel %vm705, %v1772, 0
      %v1791 = vld [vmem:[#allocation3 + $0x8] sm:$0xff]
      %v1792 = vld [vmem:[#allocation3 + $0x10] sm:$0xff]
      %v1793 = vld [vmem:[#allocation3 + $0x18] sm:$0xff]
      %v1794 = vld [vmem:[#allocation3 + $0x28] sm:$0xff]
      %v1795 = vld [vmem:[#allocation3 + $0x30] sm:$0xff]
      %v1796 = vld [vmem:[#allocation3 + $0x38] sm:$0xff]
      %v1797 = vsel %vm736, %v1791, 0
      %v1798 = vsel %vm737, %v1792, 0
      %v1799 = vsel %vm738, %v1793, 0
      %v1800 = vsel %vm736, %v1794, 0
      %v1801 = vsel %vm737, %v1795, 0
      %v1802 = vsel %vm738, %v1796, 0
      %v1803 = vsel %vm757, %v1791, 0
      %v1804 = vsel %vm758, %v1792, 0
      %v1805 = vsel %vm759, %v1793, 0
      %v1806 = vsel %vm757, %v1794, 0
      %v1807 = vsel %vm758, %v1795, 0
      %v1808 = vsel %vm759, %v1796, 0
      %v1809 = vsel %vm778, %v1791, 0
      %v1810 = vsel %vm779, %v1792, 0
      %v1811 = vsel %vm780, %v1793, 0
      %v1812 = vsel %vm778, %v1794, 0
      %v1813 = vsel %vm779, %v1795, 0
      %v1814 = vsel %vm780, %v1796, 0
      %1821 = vrot.lane.b32.xlu0 %v1767, 127
      %v1822 = vpop.permute.xlu0 %1821
      %1823 = vrot.lane.b32.xlu0 %v1768, 127
      %v1824 = vpop.permute.xlu0 %1823
      %1825 = vrot.lane.b32.xlu0 %v1769, 127
      %v1826 = vpop.permute.xlu0 %1825
      %1827 = vrot.lane.b32.xlu0 %v1770, 127
      %v1828 = vpop.permute.xlu0 %1827
      %1829 = vrot.lane.b32.xlu0 %v1771, 127
      %v1830 = vpop.permute.xlu0 %1829
      %1831 = vrot.lane.b32.xlu0 %v1772, 127
      %v1832 = vpop.permute.xlu0 %1831
      %v1833 = vsel %vm701, %v1822, %v1824
      %v1834 = vsel %vm701, %v1824, %v1826
      %v1835 = vsel %vm701, %v1828, %v1830
      %v1836 = vsel %vm701, %v1830, %v1832
      %1843 = vrot.lane.b32.xlu0 %v1779, 126
      %v1844 = vpop.permute.xlu0 %1843
      %1845 = vrot.lane.b32.xlu0 %v1780, 126
      %v1846 = vpop.permute.xlu0 %1845
      %1847 = vrot.lane.b32.xlu0 %v1781, 126
      %v1848 = vpop.permute.xlu0 %1847
      %1849 = vrot.lane.b32.xlu0 %v1782, 126
      %v1850 = vpop.permute.xlu0 %1849
      %1851 = vrot.lane.b32.xlu0 %v1783, 126
      %v1852 = vpop.permute.xlu0 %1851
      %1853 = vrot.lane.b32.xlu0 %v1784, 126
      %v1854 = vpop.permute.xlu0 %1853
      %v1855 = vsel %vm873, %v1844, %v1846
      %v1856 = vsel %vm873, %v1846, %v1848
      %v1857 = vsel %vm873, %v1850, %v1852
      %v1858 = vsel %vm873, %v1852, %v1854
      %1865 = vrot.lane.b32.xlu0 %v1785, 112
      %v1866 = vpop.permute.xlu0 %1865
      %1867 = vrot.lane.b32.xlu0 %v1786, 112
      %v1868 = vpop.permute.xlu0 %1867
      %1869 = vrot.lane.b32.xlu0 %v1787, 112
      %v1870 = vpop.permute.xlu0 %1869
      %1871 = vrot.lane.b32.xlu0 %v1788, 112
      %v1872 = vpop.permute.xlu0 %1871
      %1873 = vrot.lane.b32.xlu0 %v1789, 112
      %v1874 = vpop.permute.xlu0 %1873
      %1875 = vrot.lane.b32.xlu0 %v1790, 112
      %v1876 = vpop.permute.xlu0 %1875
      %v1877 = vsel %vm918, %v1866, %v1868
      %v1878 = vsel %vm918, %v1868, %v1870
      %v1879 = vsel %vm918, %v1872, %v1874
      %v1880 = vsel %vm918, %v1874, %v1876
      %1881 = vrot.lane.b32.xlu0 %v1768, 111
      %v1882 = vpop.permute.xlu0 %1881
      %1883 = vrot.lane.b32.xlu0 %v1769, 111
      %v1884 = vpop.permute.xlu0 %1883
      %1885 = vrot.lane.b32.xlu0 %v1771, 111
      %v1886 = vpop.permute.xlu0 %1885
      %1887 = vrot.lane.b32.xlu0 %v1772, 111
      %v1888 = vpop.permute.xlu0 %1887
      %v1889 = vsel %vm645, %v1882, %v1884
      %v1890 = vsel %vm645, %v1886, %v1888
      %1897 = vrot.lane.b32.xlu0 %v1797, 110
      %v1898 = vpop.permute.xlu0 %1897
      %1899 = vrot.lane.b32.xlu0 %v1798, 110
      %v1900 = vpop.permute.xlu0 %1899
      %1901 = vrot.lane.b32.xlu0 %v1799, 110
      %v1902 = vpop.permute.xlu0 %1901
      %1903 = vrot.lane.b32.xlu0 %v1800, 110
      %v1904 = vpop.permute.xlu0 %1903
      %1905 = vrot.lane.b32.xlu0 %v1801, 110
      %v1906 = vpop.permute.xlu0 %1905
      %1907 = vrot.lane.b32.xlu0 %v1802, 110
      %v1908 = vpop.permute.xlu0 %1907
      %v1909 = vsel %vm983, %v1898, %v1900
      %v1910 = vsel %vm983, %v1900, %v1902
      %v1911 = vsel %vm983, %v1904, %v1906
      %v1912 = vsel %vm983, %v1906, %v1908
      %1919 = vrot.lane.b32.xlu0 %v1803, 96
      %v1920 = vpop.permute.xlu0 %1919
      %1921 = vrot.lane.b32.xlu0 %v1804, 96
      %v1922 = vpop.permute.xlu0 %1921
      %1923 = vrot.lane.b32.xlu0 %v1805, 96
      %v1924 = vpop.permute.xlu0 %1923
      %1925 = vrot.lane.b32.xlu0 %v1806, 96
      %v1926 = vpop.permute.xlu0 %1925
      %1927 = vrot.lane.b32.xlu0 %v1807, 96
      %v1928 = vpop.permute.xlu0 %1927
      %1929 = vrot.lane.b32.xlu0 %v1808, 96
      %v1930 = vpop.permute.xlu0 %1929
      %v1931 = vsel %vm1028, %v1920, %v1922
      %v1932 = vsel %vm1028, %v1922, %v1924
      %v1933 = vsel %vm1028, %v1926, %v1928
      %v1934 = vsel %vm1028, %v1928, %v1930
      %1941 = vrot.lane.b32.xlu0 %v1791, 95
      %v1942 = vpop.permute.xlu0 %1941
      %1943 = vrot.lane.b32.xlu0 %v1792, 95
      %v1944 = vpop.permute.xlu0 %1943
      %1945 = vrot.lane.b32.xlu0 %v1793, 95
      %v1946 = vpop.permute.xlu0 %1945
      %1947 = vrot.lane.b32.xlu0 %v1794, 95
      %v1948 = vpop.permute.xlu0 %1947
      %1949 = vrot.lane.b32.xlu0 %v1795, 95
      %v1950 = vpop.permute.xlu0 %1949
      %1951 = vrot.lane.b32.xlu0 %v1796, 95
      %v1952 = vpop.permute.xlu0 %1951
      %v1953 = vsel %vm1073, %v1942, %v1944
      %v1954 = vsel %vm1073, %v1944, %v1946
      %v1955 = vsel %vm1073, %v1948, %v1950
      %v1956 = vsel %vm1073, %v1950, %v1952
      %1963 = vrot.lane.b32.xlu0 %v1809, 94
      %v1964 = vpop.permute.xlu0 %1963
      %1965 = vrot.lane.b32.xlu0 %v1810, 94
      %v1966 = vpop.permute.xlu0 %1965
      %1967 = vrot.lane.b32.xlu0 %v1811, 94
      %v1968 = vpop.permute.xlu0 %1967
      %1969 = vrot.lane.b32.xlu0 %v1812, 94
      %v1970 = vpop.permute.xlu0 %1969
      %1971 = vrot.lane.b32.xlu0 %v1813, 94
      %v1972 = vpop.permute.xlu0 %1971
      %1973 = vrot.lane.b32.xlu0 %v1814, 94
      %v1974 = vpop.permute.xlu0 %1973
      %v1975 = vsel %vm1118, %v1964, %v1966
      %v1976 = vsel %vm1118, %v1966, %v1968
      %v1977 = vsel %vm1118, %v1970, %v1972
      %v1978 = vsel %vm1118, %v1972, %v1974
      %v1979 = vld [vmem:[%s6] sm:$0xff]
      %v1980 = vld [vmem:[%s6 + $0x8] sm:$0xf]
      %1982 = vset.pattern.permute.xlu0 0
      %1983 = vperm.xlu0 %1982, %v1979
      %v1984 = vpop.permute.xlu0 %1983
      %1987 = vset.pattern.permute.xlu0 0
      %1988 = vperm.xlu0 %1987, %v1980
      %v1989 = vpop.permute.xlu0 %1988
      %v1995 = vunpack.c.l.b16 %v1763
      %v1996 = vunpack.c.h.b16 %v1763
      %v1997 = vunpack.c.l.b16 %v1764
      %v1998 = vunpack.c.l.b16 %v1765
      %v1999 = vunpack.c.h.b16 %v1765
      %v2000 = vunpack.c.l.b16 %v1766
      %v2001 = vpack.c.b16 %v1998, %v1995
      %v2002 = vpack.c.b16 %v1999, %v1996
      %v2003 = vpack.c.b16 %v2000, %v1997
      %2012 = vrot.lane.b32.xlu0 %v1773, 17
      %v2013 = vpop.permute.xlu0 %2012
      %2014 = vrot.lane.b32.xlu0 %v1774, 17
      %v2015 = vpop.permute.xlu0 %2014
      %2016 = vrot.lane.b32.xlu0 %v1775, 17
      %v2017 = vpop.permute.xlu0 %2016
      %2018 = vrot.lane.b32.xlu0 %v1776, 17
      %v2019 = vpop.permute.xlu0 %2018
      %2020 = vrot.lane.b32.xlu0 %v1777, 17
      %v2021 = vpop.permute.xlu0 %2020
      %2022 = vrot.lane.b32.xlu0 %v1778, 17
      %v2023 = vpop.permute.xlu0 %2022
      %2024 = vrot.lane.b32.xlu0 %v1833, 17
      %v2025 = vpop.permute.xlu0 %2024
      %2026 = vrot.lane.b32.xlu0 %v1834, 17
      %v2027 = vpop.permute.xlu0 %2026
      %2028 = vrot.lane.b32.xlu0 %v1826, 17
      %v2029 = vpop.permute.xlu0 %2028
      %2030 = vrot.lane.b32.xlu0 %v1835, 17
      %v2031 = vpop.permute.xlu0 %2030
      %2032 = vrot.lane.b32.xlu0 %v1836, 17
      %v2033 = vpop.permute.xlu0 %2032
      %2034 = vrot.lane.b32.xlu0 %v1832, 17
      %v2035 = vpop.permute.xlu0 %2034
      %2036 = vrot.lane.b32.xlu0 %v1855, 17
      %v2037 = vpop.permute.xlu0 %2036
      %2038 = vrot.lane.b32.xlu0 %v1856, 17
      %v2039 = vpop.permute.xlu0 %2038
      %2040 = vrot.lane.b32.xlu0 %v1848, 17
      %v2041 = vpop.permute.xlu0 %2040
      %2042 = vrot.lane.b32.xlu0 %v1857, 17
      %v2043 = vpop.permute.xlu0 %2042
      %2044 = vrot.lane.b32.xlu0 %v1858, 17
      %v2045 = vpop.permute.xlu0 %2044
      %2046 = vrot.lane.b32.xlu0 %v1854, 17
      %v2047 = vpop.permute.xlu0 %2046
      %2048 = vrot.lane.b32.xlu0 %v1877, 17
      %v2049 = vpop.permute.xlu0 %2048
      %2050 = vrot.lane.b32.xlu0 %v1878, 17
      %v2051 = vpop.permute.xlu0 %2050
      %2052 = vrot.lane.b32.xlu0 %v1870, 17
      %v2053 = vpop.permute.xlu0 %2052
      %2054 = vrot.lane.b32.xlu0 %v1879, 17
      %v2055 = vpop.permute.xlu0 %2054
      %2056 = vrot.lane.b32.xlu0 %v1880, 17
      %v2057 = vpop.permute.xlu0 %2056
      %2058 = vrot.lane.b32.xlu0 %v1876, 17
      %v2059 = vpop.permute.xlu0 %2058
      %2060 = vrot.lane.b32.xlu0 %v1882, 17
      %v2061 = vpop.permute.xlu0 %2060
      %2062 = vrot.lane.b32.xlu0 %v1889, 17
      %v2063 = vpop.permute.xlu0 %2062
      %2064 = vrot.lane.b32.xlu0 %v1884, 17
      %v2065 = vpop.permute.xlu0 %2064
      %2066 = vrot.lane.b32.xlu0 %v1886, 17
      %v2067 = vpop.permute.xlu0 %2066
      %2068 = vrot.lane.b32.xlu0 %v1890, 17
      %v2069 = vpop.permute.xlu0 %2068
      %2070 = vrot.lane.b32.xlu0 %v1888, 17
      %v2071 = vpop.permute.xlu0 %2070
      %2072 = vrot.lane.b32.xlu0 %v1898, 17
      %v2073 = vpop.permute.xlu0 %2072
      %2074 = vrot.lane.b32.xlu0 %v1909, 17
      %v2075 = vpop.permute.xlu0 %2074
      %2076 = vrot.lane.b32.xlu0 %v1910, 17
      %v2077 = vpop.permute.xlu0 %2076
      %2078 = vrot.lane.b32.xlu0 %v1904, 17
      %v2079 = vpop.permute.xlu0 %2078
      %2080 = vrot.lane.b32.xlu0 %v1911, 17
      %v2081 = vpop.permute.xlu0 %2080
      %2082 = vrot.lane.b32.xlu0 %v1912, 17
      %v2083 = vpop.permute.xlu0 %2082
      %2084 = vrot.lane.b32.xlu0 %v1920, 17
      %v2085 = vpop.permute.xlu0 %2084
      %2086 = vrot.lane.b32.xlu0 %v1931, 17
      %v2087 = vpop.permute.xlu0 %2086
      %2088 = vrot.lane.b32.xlu0 %v1932, 17
      %v2089 = vpop.permute.xlu0 %2088
      %2090 = vrot.lane.b32.xlu0 %v1926, 17
      %v2091 = vpop.permute.xlu0 %2090
      %2092 = vrot.lane.b32.xlu0 %v1933, 17
      %v2093 = vpop.permute.xlu0 %2092
      %2094 = vrot.lane.b32.xlu0 %v1934, 17
      %v2095 = vpop.permute.xlu0 %2094
      %2096 = vrot.lane.b32.xlu0 %v1942, 17
      %v2097 = vpop.permute.xlu0 %2096
      %2098 = vrot.lane.b32.xlu0 %v1953, 17
      %v2099 = vpop.permute.xlu0 %2098
      %2100 = vrot.lane.b32.xlu0 %v1954, 17
      %v2101 = vpop.permute.xlu0 %2100
      %2102 = vrot.lane.b32.xlu0 %v1948, 17
      %v2103 = vpop.permute.xlu0 %2102
      %2104 = vrot.lane.b32.xlu0 %v1955, 17
      %v2105 = vpop.permute.xlu0 %2104
      %2106 = vrot.lane.b32.xlu0 %v1956, 17
      %v2107 = vpop.permute.xlu0 %2106
      %2108 = vrot.lane.b32.xlu0 %v1964, 17
      %v2109 = vpop.permute.xlu0 %2108
      %2110 = vrot.lane.b32.xlu0 %v1975, 17
      %v2111 = vpop.permute.xlu0 %2110
      %2112 = vrot.lane.b32.xlu0 %v1976, 17
      %v2113 = vpop.permute.xlu0 %2112
      %2114 = vrot.lane.b32.xlu0 %v1970, 17
      %v2115 = vpop.permute.xlu0 %2114
      %2116 = vrot.lane.b32.xlu0 %v1977, 17
      %v2117 = vpop.permute.xlu0 %2116
      %2118 = vrot.lane.b32.xlu0 %v1978, 17
      %v2119 = vpop.permute.xlu0 %2118
      %v2120 = vsel %vm776, %v2013, %v2015
      %v2121 = vsel %vm776, %v2015, %v2017
      %v2122 = vsel %vm776, %v2019, %v2021
      %v2123 = vsel %vm776, %v2021, %v2023
      %v2124 = vsel %vm776, %v2025, %v2027
      %v2125 = vsel %vm776, %v2027, %v2029
      %v2126 = vsel %vm776, %v2031, %v2033
      %v2127 = vsel %vm776, %v2033, %v2035
      %v2128 = vsel %vm776, %v2037, %v2039
      %v2129 = vsel %vm776, %v2039, %v2041
      %v2130 = vsel %vm776, %v2043, %v2045
      %v2131 = vsel %vm776, %v2045, %v2047
      %v2132 = vsel %vm776, %v2049, %v2051
      %v2133 = vsel %vm776, %v2051, %v2053
      %v2134 = vsel %vm776, %v2055, %v2057
      %v2135 = vsel %vm776, %v2057, %v2059
      %v2136 = vsel %vm776, %v2061, %v2063
      %v2137 = vsel %vm776, %v2063, %v2065
      %v2138 = vsel %vm776, %v2067, %v2069
      %v2139 = vsel %vm776, %v2069, %v2071
      %v2140 = vsel %vm776, %v2073, %v2075
      %v2141 = vsel %vm776, %v2075, %v2077
      %v2142 = vsel %vm776, %v2079, %v2081
      %v2143 = vsel %vm776, %v2081, %v2083
      %v2144 = vsel %vm776, %v2085, %v2087
      %v2145 = vsel %vm776, %v2087, %v2089
      %v2146 = vsel %vm776, %v2091, %v2093
      %v2147 = vsel %vm776, %v2093, %v2095
      %v2148 = vsel %vm776, %v2097, %v2099
      %v2149 = vsel %vm776, %v2099, %v2101
      %v2150 = vsel %vm776, %v2103, %v2105
      %v2151 = vsel %vm776, %v2105, %v2107
      %v2152 = vsel %vm776, %v2109, %v2111
      %v2153 = vsel %vm776, %v2111, %v2113
      %v2154 = vsel %vm776, %v2115, %v2117
      %v2155 = vsel %vm776, %v2117, %v2119
      %vm2192 = vcmask 261120
      %v2194 = vsel %vm2192, %v2003, 0
      %2196 = vmatprep.subr.bf16.mxu0 %v2121
      %2197 = vmatpush1.bf16.msra.mxu0 %v2120
      %2198 = vmatprep.subr.bf16.mxu0 %v2123
      %2199 = vmatpush1.bf16.msra.mxu0 %v2122
      %2200 = vmatprep.subr.bf16.mxu0 %v2125
      %2201 = vmatpush1.bf16.msra.mxu0 %v2124
      %2202 = vmatprep.subr.bf16.mxu0 %v2127
      %2203 = vmatpush1.bf16.msra.mxu0 %v2126
      %2204 = vmatprep.subr.bf16.mxu0 %v2129
      %2205 = vmatpush1.bf16.msra.mxu0 %v2128
      %2206 = vmatprep.subr.bf16.mxu0 %v2131
      %2207 = vmatpush1.bf16.msra.mxu0 %v2130
      %2208 = vmatprep.subr.bf16.mxu0 %v2133
      %2209 = vmatpush1.bf16.msra.mxu0 %v2132
      %2210 = vmatprep.subr.bf16.mxu0 %v2135
      %2211 = vmatpush1.bf16.msra.mxu0 %v2134
      %2212 = vmatprep.subr.bf16.mxu0 %v2137
      %2213 = vmatpush1.bf16.msra.mxu0 %v2136
      %2214 = vmatprep.subr.bf16.mxu0 %v2139
      %2215 = vmatpush1.bf16.msra.mxu0 %v2138
      %2216 = vmatprep.subr.bf16.mxu0 %v2141
      %2217 = vmatpush1.bf16.msra.mxu0 %v2140
      %2218 = vmatprep.subr.bf16.mxu0 %v2143
      %2219 = vmatpush1.bf16.msra.mxu0 %v2142
      %2220 = vmatprep.subr.bf16.mxu0 %v2145
      %2221 = vmatpush1.bf16.msra.mxu0 %v2144
      %2222 = vmatprep.subr.bf16.mxu0 %v2147
      %2223 = vmatpush1.bf16.msra.mxu0 %v2146
      %2224 = vmatprep.subr.bf16.mxu0 %v2149
      %2225 = vmatpush1.bf16.msra.mxu0 %v2148
      %2226 = vmatprep.subr.bf16.mxu0 %v2151
      %2227 = vmatpush1.bf16.msra.mxu0 %v2150
      %2228 = vmatprep.mubr.bf16.mxu0 %v2002
      %2229 = vmatmul.mubr.bf16.gmra.mrb[0].mxu0 %v2001
      %v2230 = vpop.f32.mrb[0].mxu0
      %v2231 = vadd.f32 %v1984, %v2230
      %v2232 = vpop.f32.mrb[0].mxu0
      %v2233 = vadd.f32 %v1984, %v2232
      %v2234 = vpop.f32.mrb[0].mxu0
      %v2235 = vadd.f32 %v1989, %v2234
      %v2236 = vpop.f32.mrb[0].mxu0
      %v2237 = vadd.f32 %v1989, %v2236
      %2238 = vdwg.mxu0
      %2239 = vmatprep.subr.bf16.mxu0 %v2153
      %2240 = vmatpush1.bf16.msra.mxu0 %v2152
      %2241 = vmatprep.subr.bf16.mxu0 %v2155
      %2242 = vmatpush1.bf16.msra.mxu0 %v2154
      %2243 = vmatprep.subr.bf16.mxu0 0
      %2244 = vmatpush1.bf16.msra.mxu0 0
      %2245 = vmatprep.subr.bf16.mxu0 0
      %2246 = vmatpush1.bf16.msra.mxu0 0
      %2247 = vmatprep.subr.bf16.mxu0 0
      %2248 = vmatpush1.bf16.msra.mxu0 0
      %2249 = vmatprep.subr.bf16.mxu0 0
      %2250 = vmatpush1.bf16.msra.mxu0 0
      %2251 = vmatprep.subr.bf16.mxu0 0
      %2252 = vmatpush1.bf16.msra.mxu0 0
      %2253 = vmatprep.subr.bf16.mxu0 0
      %2254 = vmatpush1.bf16.msra.mxu0 0
      %2255 = vmatprep.subr.bf16.mxu0 0
      %2256 = vmatpush1.bf16.msra.mxu0 0
      %2257 = vmatprep.subr.bf16.mxu0 0
      %2258 = vmatpush1.bf16.msra.mxu0 0
      %2259 = vmatprep.subr.bf16.mxu0 0
      %2260 = vmatpush1.bf16.msra.mxu0 0
      %2261 = vmatprep.subr.bf16.mxu0 0
      %2262 = vmatpush1.bf16.msra.mxu0 0
      %2263 = vmatprep.subr.bf16.mxu0 0
      %2264 = vmatpush1.bf16.msra.mxu0 0
      %2265 = vmatprep.subr.bf16.mxu0 0
      %2266 = vmatpush1.bf16.msra.mxu0 0
      %2267 = vmatprep.subr.bf16.mxu0 0
      %2268 = vmatpush1.bf16.msra.mxu0 0
      %2269 = vmatprep.subr.bf16.mxu0 0
      %2270 = vmatpush1.bf16.msra.mxu0 0
      %2271 = vmatprep.mubr.bf16.mxu0 0
      %2272 = vmatmul.mubr.bf16.gmra.mrb[0].mxu0 %v2194
      %v2273 = vpop.f32.mrb[0].mxu0
      %v2274 = vadd.f32 %v2231, %v2273
      %v2275 = vpop.f32.mrb[0].mxu0
      %v2276 = vadd.f32 %v2233, %v2275
      %v2277 = vpop.f32.mrb[0].mxu0
      %v2278 = vadd.f32 %v2235, %v2277
      %v2279 = vpop.f32.mrb[0].mxu0
      %v2280 = vadd.f32 %v2237, %v2279
      %2281 = vdwg.mxu0
      %2282 = vst [vmem:[%s278] sm:$0xff] %v2274
      %2283 = vst [vmem:[%s278 + $0x8] sm:$0xff] %v2276
      %2284 = vst [vmem:[%s278 + $0x10] sm:$0xf] %v2278
      %2285 = vst [vmem:[%s278 + $0x18] sm:$0xf] %v2280
      %p2286 = scmp.lt.s32.totalorder %s18, 1
      %s2287 = scalar_select %p2286, %s18, 1
      %s2288 = smul.addr %s2287, 4
      %s2289 = smul.addr %s2288, 8
      %s2290 = scalar_lea.vmem %s7, %s2289
      // Predicated region
      $region49: #{conv_sub_pixel_forward.1} parent=47 // pred_check
        %p2291 = pneg %p188
      $region50: #{conv_sub_pixel_forward.1} parent=47 // pred_check_branch
        %2293 = sbr.rel (%p2291) target = $region52
      $region51: #{conv_sub_pixel_forward.1} parent=47 // pred_region
        _
      $region52: #{conv_sub_pixel_forward.1} parent=47 // pred_fallthru
        _
    $region48: #{conv_sub_pixel_forward.1} parent=5 // pred_fallthru
      _
    %p2294 = scmp.le.s32.totalorder 2, %s13
    // Predicated region
    $region53: #{conv_sub_pixel_forward.1} parent=5 // pred_check
      %p2295 = pneg %p2294
    $region54: #{conv_sub_pixel_forward.1} parent=5 // pred_check_branch
      %2297 = sbr.rel (%p2295) target = $region56
    $region55: #{conv_sub_pixel_forward.1} parent=5 // pred_region
      %s2298 = ssub.s32 %s13, 2
      // Predicated region
      $region57: #{conv_sub_pixel_forward.1} parent=55 // pred_check
        %p2299 = pneg %p194
      $region58: #{conv_sub_pixel_forward.1} parent=55 // pred_check_branch
        %2301 = sbr.rel (%p2299) target = $region60
      $region59: #{conv_sub_pixel_forward.1} parent=55 // pred_region
        %p2302 = scmp.lt.s32.totalorder %s19, 1
        %s2303 = scalar_select %p2302, %s19, 1
        %s2304 = smul.addr %s2303, 4
        %s2305 = smul.addr %s2304, 8
        %s2306 = scalar_lea.vmem %s7, %s2305
      $region60: #{conv_sub_pixel_forward.1} parent=55 // pred_fallthru
        _
    $region56: #{conv_sub_pixel_forward.1} parent=5 // pred_fallthru
      _
  $region6: #{conv_sub_pixel_forward.1} parent=0 // loop_footer
    %s17 = sadd.s32 1, %s13
  $region7: #{conv_sub_pixel_forward.1} parent=0 // loop_footer_branch
    %12 = sbr.rel target = $region3
  $region8: #{conv_sub_pixel_forward.1} parent=0 // loop_exit
    _

</llo_original>
